<compile_context>
chip_gen: v7x
topology: tpu7x:2x2x1
jax: 0.10.0
libtpu: 0.0.40
codegen_flags: <defaults>
</compile_context>

<pallas_src>
import jax
import jax.numpy as jnp
from jax.experimental import pallas as pl
from jax.experimental.pallas import tpu as pltpu


def decoder_kernel(emb_ref, feat_ref, w_x_ref, b_x_ref, w_h_ref,
                   w_att_gate_ref, w_lin_ref, b_lin_ref, out_ref):
    """One-shot forward for the whole (padded) batch and all time steps.

    emb_ref       : (T*B, E)    time-major flattened embeddings (B = padded)
    feat_ref      : (L, B, H)   image features in (L, B, H) layout
    w_x_ref       : (E, 4H+Lp)  [w_ih_x | w_attn_x];  g-gate cols pre-scaled x2
    b_x_ref       : (1, 4H+Lp)  [b_ih+b_hh | b_attn]; g-gate cols pre-scaled x2
    w_h_ref       : (H, 4H+Lp)  [w_hh | w_attn_h];    g-gate cols pre-scaled x2
    w_att_gate_ref: (H, 4H)     attention-context -> gates; g-gate cols x2
    w_lin_ref     : (H, Vp)     output projection (vocab padded to lane mult.)
    b_lin_ref     : (1, Vp)
    out_ref       : (T*B, Vp)   lane-dense padded logits
    """
    L, B, H = feat_ref.shape
    TB, E = emb_ref.shape
    n_steps = TB // B
    H4 = 4 * H

    feat = feat_ref[...]                       # (L, B, H)
    w_h = w_h_ref[...]                         # (H, 4H+Lp)
    w_att_gate = w_att_gate_ref[...]           # (H, 4H)

    # ---- hoisted + fused x-dependent projection: ONE MXU pass producing both
    # the LSTM-input gate contribution and the attention logits, biases folded.
    x_all = (jnp.dot(emb_ref[...], w_x_ref[...],
                     preferred_element_type=jnp.float32)
             + b_x_ref[...])                   # (T*B, 4H+Lp)
    # TODO(synk): at large T*B spill x_all to a VMEM scratch and slice per
    # step (and switch to lax.fori_loop(unroll=True)) to bound vreg pressure.

    h = jnp.zeros((B, H), jnp.float32)
    c = jnp.zeros((B, H), jnp.float32)

    # step-0 attention input = mean over L (pure VPU adds on (B, H) slabs).
    att = feat[0]
    for l in range(1, L):
        att = att + feat[l]
    att = att * (1.0 / L)

    hs = []                                    # hidden states stay in vregs
    for step in range(n_steps):                # small T -> full unroll
        lo = step * B
        x_step = x_all[lo:lo + B, :]           # (B, 4H+Lp)

        if step == 0:
            # h == 0 -> the fused h-projection is all zeros; skip it.
            gates = x_step[:, :H4] + jnp.dot(
                att, w_att_gate, preferred_element_type=jnp.float32)
        else:
            # single fused h-projection: LSTM recurrence + attention logits.
            h_proj = jnp.dot(h, w_h, preferred_element_type=jnp.float32)

            # attention: relu -> shift-stable softmax over L -> weighted sum
            a = x_step[:, H4:H4 + L] + h_proj[:, H4:H4 + L]     # (B, L)
            r = jnp.maximum(a, 0.0)
            r = r - jnp.max(r, axis=-1, keepdims=True)          # XLU, cheap
            ex = jnp.exp(r)
            inv = pl.reciprocal(jnp.sum(ex, axis=-1, keepdims=True),
                                approx=True)                    # EUP
            att_w = ex * inv                                    # (B, L)
            # unrolled L-term VPU multiply-accumulate over (B, H) slabs
            att = att_w[:, 0:1] * feat[0]
            for l in range(1, L):
                att = att + att_w[:, l:l + 1] * feat[l]

            gates = (x_step[:, :H4] + h_proj[:, :H4]
                     + jnp.dot(att, w_att_gate,
                               preferred_element_type=jnp.float32))

        # single sigmoid over all 4H gate lanes; the g-gate tanh is recovered
        # via tanh(z) = 2*sigmoid(2z) - 1 (g-gate columns pre-scaled by 2).
        sg = jax.nn.sigmoid(gates)
        i_g = sg[:, 0 * H:1 * H]
        f_g = sg[:, 1 * H:2 * H]
        g_g = 2.0 * sg[:, 2 * H:3 * H] - 1.0
        o_g = sg[:, 3 * H:4 * H]
        c = f_g * c + i_g * g_g
        h = o_g * jnp.tanh(c)
        hs.append(h)

    # ---- hoisted output projection: one matmul + one lane-dense store ----
    # TODO(synk): for real vocab/hidden sizes (v7x: 64 MiB VMEM, 2 TCs) move
    # this projection into a second pallas_call gridded over V with
    # dimension_semantics=("parallel",) instead of the single-grid-point form.
    h_all = jnp.concatenate(hs, axis=0)        # (T*B, H), never leaves vregs
    out_ref[...] = (jnp.dot(h_all, w_lin_ref[...],
                            preferred_element_type=jnp.float32)
                    + b_lin_ref[...])


def run_decoder_pallas(embeddings, features, w_ih_t, w_hh_t, b_lstm,
                       w_attn_t, b_attn, w_lin_t, b_lin):
    """embeddings (B, T-1, E), features (B, L, H); weights pre-transposed to
    (in_features, out_features); b_lstm = b_ih + b_hh with shape (1, 4H)."""
    B, n_steps, E = embeddings.shape
    _, L, H = features.shape
    V = w_lin_t.shape[1]
    H4 = 4 * H

    B_pad = max(8, ((B + 7) // 8) * 8)              # f32 sublane multiple
    V_pad = ((V + 127) // 128) * 128                # lane multiple
    W = ((H4 + L + 127) // 128) * 128               # fused gate+attn width

    # g-gate columns pre-scaled by 2 so the kernel can use a single sigmoid
    # over the gates and recover tanh via 2*sigmoid(2z) - 1.
    g_scale = jnp.ones((H4,), jnp.float32).at[2 * H:3 * H].set(2.0)[None, :]

    # Split the PyTorch weights into x / attention-context / hidden parts.
    w_ih_x, w_ih_att = w_ih_t[:E], w_ih_t[E:]            # (E,4H), (H,4H)
    w_attn_x, w_attn_h = w_attn_t[:E], w_attn_t[E:]      # (E,L),  (H,L)

    # Fused x projection [gates | attention logits], biases folded in.
    w_x = jnp.zeros((E, W), jnp.float32)
    w_x = w_x.at[:, :H4].set(w_ih_x * g_scale)
    w_x = w_x.at[:, H4:H4 + L].set(w_attn_x)
    b_x = jnp.zeros((1, W), jnp.float32)
    b_x = b_x.at[:, :H4].set(b_lstm * g_scale)
    b_x = b_x.at[:, H4:H4 + L].set(b_attn)

    # Fused h projection [w_hh | w_attn_h].
    w_h = jnp.zeros((H, W), jnp.float32)
    w_h = w_h.at[:, :H4].set(w_hh_t * g_scale)
    w_h = w_h.at[:, H4:H4 + L].set(w_attn_h)

    # Attention-context -> gates weight (g-gate columns scaled).
    w_att_gate = w_ih_att * g_scale                      # (H, 4H)

    # Output projection padded to a lane multiple (unmasked stores).
    w_lin_p = jnp.zeros((H, V_pad), jnp.float32).at[:, :V].set(w_lin_t)
    b_lin_p = jnp.zeros((1, V_pad), jnp.float32).at[:, :V].set(b_lin)

    # Pad batch; features go to (L, B_pad, H) so feat[l] is a clean (B, H) slab.
    emb_p = jnp.zeros((B_pad, n_steps, E), jnp.float32).at[:B].set(embeddings)
    feat_p = jnp.zeros((L, B_pad, H), jnp.float32).at[:, :B].set(
        jnp.transpose(features, (1, 0, 2)))

    # Time-major + flattened so each step's rows form one contiguous tile.
    emb_tm = emb_p.transpose(1, 0, 2).reshape(n_steps * B_pad, E)

    vmem = pl.BlockSpec(memory_space=pltpu.MemorySpace.VMEM)
    out_flat = pl.pallas_call(
        decoder_kernel,
        out_shape=jax.ShapeDtypeStruct((n_steps * B_pad, V_pad), jnp.float32),
        in_specs=[vmem] * 8,
        out_specs=vmem,
    )(emb_tm, feat_p, w_x, b_x, w_h, w_att_gate, w_lin_p, b_lin_p)

    # (T*Bp, Vp) -> (B, T-1, V): drop padding, back to batch-major.
    out = out_flat.reshape(n_steps, B_pad, V_pad)[:, :B, :V]
    return out.transpose(1, 0, 2)


def reference_forward(embeddings, features, w_ih_t, w_hh_t, b_lstm,
                      w_attn_t, b_attn, w_lin_t, b_lin):
    """Pure-JAX reference (same math, full-precision matmuls, no Pallas)."""
    with jax.default_matmul_precision("highest"):
        B, n_steps, _ = embeddings.shape
        H = w_hh_t.shape[0]
        h = jnp.zeros((B, H), jnp.float32)
        c = jnp.zeros((B, H), jnp.float32)
        att = jnp.mean(features, axis=1)
        outs = []
        for step in range(n_steps):
            x = embeddings[:, step, :]
            if step != 0:
                cat = jnp.concatenate([x, h], axis=-1)
                a = jnp.maximum(cat @ w_attn_t + b_attn, 0.0)
                w = jax.nn.softmax(a, axis=-1)
                att = jnp.einsum('bl,blh->bh', w, features)
            lstm_in = jnp.concatenate([x, att], axis=-1)
            gates = lstm_in @ w_ih_t + h @ w_hh_t + b_lstm
            i_g, f_g, g_g, o_g = jnp.split(gates, 4, axis=-1)
            i_g = jax.nn.sigmoid(i_g)
            f_g = jax.nn.sigmoid(f_g)
            g_g = jnp.tanh(g_g)
            o_g = jax.nn.sigmoid(o_g)
            c = f_g * c + i_g * g_g
            h = o_g * jnp.tanh(c)
            outs.append(h @ w_lin_t + b_lin)
        return jnp.stack(outs, axis=1)


def pack_padded(outputs, lengths):
    """Equivalent of pack_padded_sequence(batch_first=True)[0].
    `lengths` must be a descending-sorted Python list."""
    # TODO(synk): pack_padded_sequence is index bookkeeping; kept as host glue.
    rows = []
    for t in range(max(lengths)):
        bs = sum(1 for l in lengths if l > t)
        rows.append(outputs[:bs, t, :])
    return jnp.concatenate(rows, axis=0)


if __name__ == "__main__":
    # Hyperparameters implied by the module's __init__ (small synthetic sizes).
    B = 2
    vocab_size = 48
    embed_size = 32        # params['embed_size']
    hidden_size = 32       # params['rnn_hidden_size']
    att_L = 4              # params['att_L']
    cap_max_len = 8        # params['cap_max_len']
    n_steps = cap_max_len - 1   # forward loops over max_seq_length - 1 steps
    # NOTE: get_start_states gives (1, B, H) so rnn_num_layers == 1.

    key = jax.random.PRNGKey(0)
    ks = jax.random.split(key, 12)
    s = 0.1

    # Deterministic synthetic parameters (PyTorch weight layouts).
    embed_table = jax.random.normal(ks[0], (vocab_size, embed_size), jnp.float32) * s
    w_ih = jax.random.normal(ks[1], (4 * hidden_size, embed_size + hidden_size), jnp.float32) * s
    w_hh = jax.random.normal(ks[2], (4 * hidden_size, hidden_size), jnp.float32) * s
    b_ih = jax.random.normal(ks[3], (4 * hidden_size,), jnp.float32) * s
    b_hh = jax.random.normal(ks[4], (4 * hidden_size,), jnp.float32) * s
    w_attn = jax.random.normal(ks[5], (att_L, embed_size + hidden_size), jnp.float32) * s
    b_attn = jax.random.normal(ks[6], (att_L,), jnp.float32) * s
    w_lin = jax.random.normal(ks[7], (vocab_size, hidden_size), jnp.float32) * s
    b_lin = jax.random.normal(ks[8], (vocab_size,), jnp.float32) * s

    # Inputs: features (B, att_L, H), captions (B, T), descending lengths.
    features = jax.random.normal(ks[9], (B, att_L, hidden_size), jnp.float32) * s
    captions = jax.random.randint(ks[10], (B, cap_max_len), 0, vocab_size)
    lengths = [7, 5]

    # Glue: embedding gather (nn.Embedding) outside the kernel.
    # TODO(synk): nn.Embedding lookup stays in JAX glue (no Pallas gather here).
    embeddings = embed_table[captions][:, :n_steps, :]      # (B, T-1, E)

    # Pre-transpose weights to (in, out); fold the two LSTM biases.
    w_ih_t = w_ih.T
    w_hh_t = w_hh.T
    b_lstm = (b_ih + b_hh).reshape(1, -1)
    w_attn_t = w_attn.T
    b_attn_2d = b_attn.reshape(1, -1)
    w_lin_t = w_lin.T
    b_lin_2d = b_lin.reshape(1, -1)

    out = run_decoder_pallas(embeddings, features, w_ih_t, w_hh_t, b_lstm,
                             w_attn_t, b_attn_2d, w_lin_t, b_lin_2d)
    out = jax.block_until_ready(out)

    ref = reference_forward(embeddings, features, w_ih_t, w_hh_t, b_lstm,
                            w_attn_t, b_attn_2d, w_lin_t, b_lin_2d)

    # Glue: pack_padded_sequence(..., batch_first=True)[0]
    packed = pack_padded(out, lengths)          # (sum(lengths), V) == (12, 48)
    packed_ref = pack_padded(ref, lengths)

    assert packed.shape == (sum(lengths), vocab_size), packed.shape
    max_err = float(jnp.max(jnp.abs(packed - packed_ref)))
    assert jnp.allclose(packed, packed_ref, atol=2e-3, rtol=2e-3), max_err

    print("KERNEL_OK")
</pallas_src>

<mosaic_0001>
module attributes {stable_mosaic.version = 11 : i64} {
  func.func @decoder_kernel(%arg0: memref<56x32xf32, #tpu.memory_space<vmem>>, %arg1: memref<4x8x32xf32, #tpu.memory_space<vmem>>, %arg2: memref<32x256xf32, #tpu.memory_space<vmem>>, %arg3: memref<1x256xf32, #tpu.memory_space<vmem>>, %arg4: memref<32x256xf32, #tpu.memory_space<vmem>>, %arg5: memref<32x128xf32, #tpu.memory_space<vmem>>, %arg6: memref<32x128xf32, #tpu.memory_space<vmem>>, %arg7: memref<1x128xf32, #tpu.memory_space<vmem>>, %arg8: memref<56x128xf32, #tpu.memory_space<vmem>>) attributes {dimension_semantics = [], scalar_prefetch = 0 : i64, scratch_operands = 0 : i64, tpu.core_type = #tpu.core_type<tc>} {
    %c0 = arith.constant 0 : index
    %c0_0 = arith.constant 0 : index
    %c0_1 = arith.constant 0 : index
    %0 = vector.load %arg1[%c0, %c0_0, %c0_1] : memref<4x8x32xf32, #tpu.memory_space<vmem>>, vector<4x8x32xf32>
    %c0_2 = arith.constant 0 : index
    %c0_3 = arith.constant 0 : index
    %1 = vector.load %arg4[%c0_2, %c0_3] : memref<32x256xf32, #tpu.memory_space<vmem>>, vector<32x256xf32>
    %c0_4 = arith.constant 0 : index
    %c0_5 = arith.constant 0 : index
    %2 = vector.load %arg5[%c0_4, %c0_5] : memref<32x128xf32, #tpu.memory_space<vmem>>, vector<32x128xf32>
    %c0_6 = arith.constant 0 : index
    %c0_7 = arith.constant 0 : index
    %3 = vector.load %arg0[%c0_6, %c0_7] : memref<56x32xf32, #tpu.memory_space<vmem>>, vector<56x32xf32>
    %c0_8 = arith.constant 0 : index
    %c0_9 = arith.constant 0 : index
    %4 = vector.load %arg2[%c0_8, %c0_9] : memref<32x256xf32, #tpu.memory_space<vmem>>, vector<32x256xf32>
    %cst = arith.constant dense<0.000000e+00> : vector<56x256xf32>
    %5 = tpu.matmul %3, %4, %cst {dimension_numbers = #tpu.dot_dimension_numbers<[1], [0], [0], [1], [0, 0, 1, 1], [], []>} : vector<56x32xf32>, vector<32x256xf32>, vector<56x256xf32> -> vector<56x256xf32>
    %c0_10 = arith.constant 0 : index
    %c0_11 = arith.constant 0 : index
    %6 = vector.load %arg3[%c0_10, %c0_11] : memref<1x256xf32, #tpu.memory_space<vmem>>, vector<1x256xf32>
    %7 = vector.broadcast %6 : vector<1x256xf32> to vector<56x256xf32>
    %8 = arith.addf %5, %7 : vector<56x256xf32>
    %cst_12 = arith.constant 0.000000e+00 : f32
    %9 = vector.broadcast %cst_12 : f32 to vector<8x32xf32>
    %10 = vector.extract_strided_slice %0 {offsets = [0, 0, 0], sizes = [1, 8, 32], strides = [1, 1, 1]} : vector<4x8x32xf32> to vector<1x8x32xf32>
    %11 = vector.shape_cast %10 : vector<1x8x32xf32> to vector<8x32xf32>
    %12 = vector.extract_strided_slice %0 {offsets = [1, 0, 0], sizes = [1, 8, 32], strides = [1, 1, 1]} : vector<4x8x32xf32> to vector<1x8x32xf32>
    %13 = vector.shape_cast %12 : vector<1x8x32xf32> to vector<8x32xf32>
    %14 = arith.addf %11, %13 : vector<8x32xf32>
    %15 = vector.extract_strided_slice %0 {offsets = [2, 0, 0], sizes = [1, 8, 32], strides = [1, 1, 1]} : vector<4x8x32xf32> to vector<1x8x32xf32>
    %16 = vector.shape_cast %15 : vector<1x8x32xf32> to vector<8x32xf32>
    %17 = arith.addf %14, %16 : vector<8x32xf32>
    %18 = vector.extract_strided_slice %0 {offsets = [3, 0, 0], sizes = [1, 8, 32], strides = [1, 1, 1]} : vector<4x8x32xf32> to vector<1x8x32xf32>
    %19 = vector.shape_cast %18 : vector<1x8x32xf32> to vector<8x32xf32>
    %20 = arith.addf %17, %19 : vector<8x32xf32>
    %cst_13 = arith.constant 2.500000e-01 : f32
    %21 = vector.broadcast %cst_13 : f32 to vector<8x32xf32>
    %22 = arith.mulf %20, %21 : vector<8x32xf32>
    %23 = vector.extract_strided_slice %8 {offsets = [0, 0], sizes = [8, 256], strides = [1, 1]} : vector<56x256xf32> to vector<8x256xf32>
    %24 = vector.extract_strided_slice %23 {offsets = [0, 0], sizes = [8, 128], strides = [1, 1]} : vector<8x256xf32> to vector<8x128xf32>
    %cst_14 = arith.constant dense<0.000000e+00> : vector<8x128xf32>
    %25 = tpu.matmul %22, %2, %cst_14 {dimension_numbers = #tpu.dot_dimension_numbers<[1], [0], [0], [1], [0, 0, 1, 1], [], []>} : vector<8x32xf32>, vector<32x128xf32>, vector<8x128xf32> -> vector<8x128xf32>
    %26 = arith.addf %24, %25 : vector<8x128xf32>
    %27 = arith.negf %26 : vector<8x128xf32>
    %28 = math.exp %27 : vector<8x128xf32>
    %cst_15 = arith.constant 1.000000e+00 : f32
    %29 = vector.broadcast %cst_15 : f32 to vector<8x128xf32>
    %30 = arith.addf %29, %28 : vector<8x128xf32>
    %31 = arith.divf %29, %30 : vector<8x128xf32>
    %32 = vector.extract_strided_slice %31 {offsets = [0, 0], sizes = [8, 32], strides = [1, 1]} : vector<8x128xf32> to vector<8x32xf32>
    %33 = vector.extract_strided_slice %31 {offsets = [0, 32], sizes = [8, 32], strides = [1, 1]} : vector<8x128xf32> to vector<8x32xf32>
    %34 = vector.extract_strided_slice %31 {offsets = [0, 64], sizes = [8, 32], strides = [1, 1]} : vector<8x128xf32> to vector<8x32xf32>
    %cst_16 = arith.constant 2.000000e+00 : f32
    %35 = vector.broadcast %cst_16 : f32 to vector<8x32xf32>
    %36 = arith.mulf %35, %34 : vector<8x32xf32>
    %cst_17 = arith.constant 1.000000e+00 : f32
    %37 = vector.broadcast %cst_17 : f32 to vector<8x32xf32>
    %38 = arith.subf %36, %37 : vector<8x32xf32>
    %39 = vector.extract_strided_slice %31 {offsets = [0, 96], sizes = [8, 32], strides = [1, 1]} : vector<8x128xf32> to vector<8x32xf32>
    %40 = arith.mulf %33, %9 : vector<8x32xf32>
    %41 = arith.mulf %32, %38 : vector<8x32xf32>
    %42 = arith.addf %40, %41 : vector<8x32xf32>
    %43 = math.tanh %42 : vector<8x32xf32>
    %44 = arith.mulf %39, %43 : vector<8x32xf32>
    %45 = vector.extract_strided_slice %8 {offsets = [8, 0], sizes = [8, 256], strides = [1, 1]} : vector<56x256xf32> to vector<8x256xf32>
    %cst_18 = arith.constant dense<0.000000e+00> : vector<8x256xf32>
    %46 = tpu.matmul %44, %1, %cst_18 {dimension_numbers = #tpu.dot_dimension_numbers<[1], [0], [0], [1], [0, 0, 1, 1], [], []>} : vector<8x32xf32>, vector<32x256xf32>, vector<8x256xf32> -> vector<8x256xf32>
    %47 = vector.extract_strided_slice %45 {offsets = [0, 128], sizes = [8, 4], strides = [1, 1]} : vector<8x256xf32> to vector<8x4xf32>
    %48 = vector.extract_strided_slice %46 {offsets = [0, 128], sizes = [8, 4], strides = [1, 1]} : vector<8x256xf32> to vector<8x4xf32>
    %49 = arith.addf %47, %48 : vector<8x4xf32>
    %cst_19 = arith.constant 0.000000e+00 : f32
    %50 = vector.broadcast %cst_19 : f32 to vector<8x4xf32>
    %51 = arith.maximumf %49, %50 : vector<8x4xf32>
    %cst_20 = arith.constant dense<0xFF800000> : vector<8xf32>
    %52 = vector.multi_reduction <maximumf>, %51, %cst_20 [1] : vector<8x4xf32> to vector<8xf32>
    %53 = vector.shape_cast %52 : vector<8xf32> to vector<8x1xf32>
    %54 = vector.broadcast %53 : vector<8x1xf32> to vector<8x4xf32>
    %55 = arith.subf %51, %54 : vector<8x4xf32>
    %56 = math.exp %55 : vector<8x4xf32>
    %cst_21 = arith.constant dense<0.000000e+00> : vector<8xf32>
    %57 = vector.multi_reduction <add>, %56, %cst_21 [1] : vector<8x4xf32> to vector<8xf32>
    %58 = vector.shape_cast %57 : vector<8xf32> to vector<8x1xf32>
    %59 = tpu.reciprocal %58 {approx = true} : vector<8x1xf32> -> vector<8x1xf32>
    %60 = vector.broadcast %59 : vector<8x1xf32> to vector<8x4xf32>
    %61 = arith.mulf %56, %60 : vector<8x4xf32>
    %62 = vector.extract_strided_slice %61 {offsets = [0, 0], sizes = [8, 1], strides = [1, 1]} : vector<8x4xf32> to vector<8x1xf32>
    %63 = vector.extract_strided_slice %0 {offsets = [0, 0, 0], sizes = [1, 8, 32], strides = [1, 1, 1]} : vector<4x8x32xf32> to vector<1x8x32xf32>
    %64 = vector.shape_cast %63 : vector<1x8x32xf32> to vector<8x32xf32>
    %65 = vector.broadcast %62 : vector<8x1xf32> to vector<8x32xf32>
    %66 = arith.mulf %65, %64 : vector<8x32xf32>
    %67 = vector.extract_strided_slice %61 {offsets = [0, 1], sizes = [8, 1], strides = [1, 1]} : vector<8x4xf32> to vector<8x1xf32>
    %68 = vector.extract_strided_slice %0 {offsets = [1, 0, 0], sizes = [1, 8, 32], strides = [1, 1, 1]} : vector<4x8x32xf32> to vector<1x8x32xf32>
    %69 = vector.shape_cast %68 : vector<1x8x32xf32> to vector<8x32xf32>
    %70 = vector.broadcast %67 : vector<8x1xf32> to vector<8x32xf32>
    %71 = arith.mulf %70, %69 : vector<8x32xf32>
    %72 = arith.addf %66, %71 : vector<8x32xf32>
    %73 = vector.extract_strided_slice %61 {offsets = [0, 2], sizes = [8, 1], strides = [1, 1]} : vector<8x4xf32> to vector<8x1xf32>
    %74 = vector.extract_strided_slice %0 {offsets = [2, 0, 0], sizes = [1, 8, 32], strides = [1, 1, 1]} : vector<4x8x32xf32> to vector<1x8x32xf32>
    %75 = vector.shape_cast %74 : vector<1x8x32xf32> to vector<8x32xf32>
    %76 = vector.broadcast %73 : vector<8x1xf32> to vector<8x32xf32>
    %77 = arith.mulf %76, %75 : vector<8x32xf32>
    %78 = arith.addf %72, %77 : vector<8x32xf32>
    %79 = vector.extract_strided_slice %61 {offsets = [0, 3], sizes = [8, 1], strides = [1, 1]} : vector<8x4xf32> to vector<8x1xf32>
    %80 = vector.extract_strided_slice %0 {offsets = [3, 0, 0], sizes = [1, 8, 32], strides = [1, 1, 1]} : vector<4x8x32xf32> to vector<1x8x32xf32>
    %81 = vector.shape_cast %80 : vector<1x8x32xf32> to vector<8x32xf32>
    %82 = vector.broadcast %79 : vector<8x1xf32> to vector<8x32xf32>
    %83 = arith.mulf %82, %81 : vector<8x32xf32>
    %84 = arith.addf %78, %83 : vector<8x32xf32>
    %85 = vector.extract_strided_slice %45 {offsets = [0, 0], sizes = [8, 128], strides = [1, 1]} : vector<8x256xf32> to vector<8x128xf32>
    %86 = vector.extract_strided_slice %46 {offsets = [0, 0], sizes = [8, 128], strides = [1, 1]} : vector<8x256xf32> to vector<8x128xf32>
    %87 = arith.addf %85, %86 : vector<8x128xf32>
    %cst_22 = arith.constant dense<0.000000e+00> : vector<8x128xf32>
    %88 = tpu.matmul %84, %2, %cst_22 {dimension_numbers = #tpu.dot_dimension_numbers<[1], [0], [0], [1], [0, 0, 1, 1], [], []>} : vector<8x32xf32>, vector<32x128xf32>, vector<8x128xf32> -> vector<8x128xf32>
    %89 = arith.addf %87, %88 : vector<8x128xf32>
    %90 = arith.negf %89 : vector<8x128xf32>
    %91 = math.exp %90 : vector<8x128xf32>
    %cst_23 = arith.constant 1.000000e+00 : f32
    %92 = vector.broadcast %cst_23 : f32 to vector<8x128xf32>
    %93 = arith.addf %92, %91 : vector<8x128xf32>
    %94 = arith.divf %92, %93 : vector<8x128xf32>
    %95 = vector.extract_strided_slice %94 {offsets = [0, 0], sizes = [8, 32], strides = [1, 1]} : vector<8x128xf32> to vector<8x32xf32>
    %96 = vector.extract_strided_slice %94 {offsets = [0, 32], sizes = [8, 32], strides = [1, 1]} : vector<8x128xf32> to vector<8x32xf32>
    %97 = vector.extract_strided_slice %94 {offsets = [0, 64], sizes = [8, 32], strides = [1, 1]} : vector<8x128xf32> to vector<8x32xf32>
    %cst_24 = arith.constant 2.000000e+00 : f32
    %98 = vector.broadcast %cst_24 : f32 to vector<8x32xf32>
    %99 = arith.mulf %98, %97 : vector<8x32xf32>
    %cst_25 = arith.constant 1.000000e+00 : f32
    %100 = vector.broadcast %cst_25 : f32 to vector<8x32xf32>
    %101 = arith.subf %99, %100 : vector<8x32xf32>
    %102 = vector.extract_strided_slice %94 {offsets = [0, 96], sizes = [8, 32], strides = [1, 1]} : vector<8x128xf32> to vector<8x32xf32>
    %103 = arith.mulf %96, %42 : vector<8x32xf32>
    %104 = arith.mulf %95, %101 : vector<8x32xf32>
    %105 = arith.addf %103, %104 : vector<8x32xf32>
    %106 = math.tanh %105 : vector<8x32xf32>
    %107 = arith.mulf %102, %106 : vector<8x32xf32>
    %108 = vector.extract_strided_slice %8 {offsets = [16, 0], sizes = [8, 256], strides = [1, 1]} : vector<56x256xf32> to vector<8x256xf32>
    %cst_26 = arith.constant dense<0.000000e+00> : vector<8x256xf32>
    %109 = tpu.matmul %107, %1, %cst_26 {dimension_numbers = #tpu.dot_dimension_numbers<[1], [0], [0], [1], [0, 0, 1, 1], [], []>} : vector<8x32xf32>, vector<32x256xf32>, vector<8x256xf32> -> vector<8x256xf32>
    %110 = vector.extract_strided_slice %108 {offsets = [0, 128], sizes = [8, 4], strides = [1, 1]} : vector<8x256xf32> to vector<8x4xf32>
    %111 = vector.extract_strided_slice %109 {offsets = [0, 128], sizes = [8, 4], strides = [1, 1]} : vector<8x256xf32> to vector<8x4xf32>
    %112 = arith.addf %110, %111 : vector<8x4xf32>
    %cst_27 = arith.constant 0.000000e+00 : f32
    %113 = vector.broadcast %cst_27 : f32 to vector<8x4xf32>
    %114 = arith.maximumf %112, %113 : vector<8x4xf32>
    %cst_28 = arith.constant dense<0xFF800000> : vector<8xf32>
    %115 = vector.multi_reduction <maximumf>, %114, %cst_28 [1] : vector<8x4xf32> to vector<8xf32>
    %116 = vector.shape_cast %115 : vector<8xf32> to vector<8x1xf32>
    %117 = vector.broadcast %116 : vector<8x1xf32> to vector<8x4xf32>
    %118 = arith.subf %114, %117 : vector<8x4xf32>
    %119 = math.exp %118 : vector<8x4xf32>
    %cst_29 = arith.constant dense<0.000000e+00> : vector<8xf32>
    %120 = vector.multi_reduction <add>, %119, %cst_29 [1] : vector<8x4xf32> to vector<8xf32>
    %121 = vector.shape_cast %120 : vector<8xf32> to vector<8x1xf32>
    %122 = tpu.reciprocal %121 {approx = true} : vector<8x1xf32> -> vector<8x1xf32>
    %123 = vector.broadcast %122 : vector<8x1xf32> to vector<8x4xf32>
    %124 = arith.mulf %119, %123 : vector<8x4xf32>
    %125 = vector.extract_strided_slice %124 {offsets = [0, 0], sizes = [8, 1], strides = [1, 1]} : vector<8x4xf32> to vector<8x1xf32>
    %126 = vector.extract_strided_slice %0 {offsets = [0, 0, 0], sizes = [1, 8, 32], strides = [1, 1, 1]} : vector<4x8x32xf32> to vector<1x8x32xf32>
    %127 = vector.shape_cast %126 : vector<1x8x32xf32> to vector<8x32xf32>
    %128 = vector.broadcast %125 : vector<8x1xf32> to vector<8x32xf32>
    %129 = arith.mulf %128, %127 : vector<8x32xf32>
    %130 = vector.extract_strided_slice %124 {offsets = [0, 1], sizes = [8, 1], strides = [1, 1]} : vector<8x4xf32> to vector<8x1xf32>
    %131 = vector.extract_strided_slice %0 {offsets = [1, 0, 0], sizes = [1, 8, 32], strides = [1, 1, 1]} : vector<4x8x32xf32> to vector<1x8x32xf32>
    %132 = vector.shape_cast %131 : vector<1x8x32xf32> to vector<8x32xf32>
    %133 = vector.broadcast %130 : vector<8x1xf32> to vector<8x32xf32>
    %134 = arith.mulf %133, %132 : vector<8x32xf32>
    %135 = arith.addf %129, %134 : vector<8x32xf32>
    %136 = vector.extract_strided_slice %124 {offsets = [0, 2], sizes = [8, 1], strides = [1, 1]} : vector<8x4xf32> to vector<8x1xf32>
    %137 = vector.extract_strided_slice %0 {offsets = [2, 0, 0], sizes = [1, 8, 32], strides = [1, 1, 1]} : vector<4x8x32xf32> to vector<1x8x32xf32>
    %138 = vector.shape_cast %137 : vector<1x8x32xf32> to vector<8x32xf32>
    %139 = vector.broadcast %136 : vector<8x1xf32> to vector<8x32xf32>
    %140 = arith.mulf %139, %138 : vector<8x32xf32>
    %141 = arith.addf %135, %140 : vector<8x32xf32>
    %142 = vector.extract_strided_slice %124 {offsets = [0, 3], sizes = [8, 1], strides = [1, 1]} : vector<8x4xf32> to vector<8x1xf32>
    %143 = vector.extract_strided_slice %0 {offsets = [3, 0, 0], sizes = [1, 8, 32], strides = [1, 1, 1]} : vector<4x8x32xf32> to vector<1x8x32xf32>
    %144 = vector.shape_cast %143 : vector<1x8x32xf32> to vector<8x32xf32>
    %145 = vector.broadcast %142 : vector<8x1xf32> to vector<8x32xf32>
    %146 = arith.mulf %145, %144 : vector<8x32xf32>
    %147 = arith.addf %141, %146 : vector<8x32xf32>
    %148 = vector.extract_strided_slice %108 {offsets = [0, 0], sizes = [8, 128], strides = [1, 1]} : vector<8x256xf32> to vector<8x128xf32>
    %149 = vector.extract_strided_slice %109 {offsets = [0, 0], sizes = [8, 128], strides = [1, 1]} : vector<8x256xf32> to vector<8x128xf32>
    %150 = arith.addf %148, %149 : vector<8x128xf32>
    %cst_30 = arith.constant dense<0.000000e+00> : vector<8x128xf32>
    %151 = tpu.matmul %147, %2, %cst_30 {dimension_numbers = #tpu.dot_dimension_numbers<[1], [0], [0], [1], [0, 0, 1, 1], [], []>} : vector<8x32xf32>, vector<32x128xf32>, vector<8x128xf32> -> vector<8x128xf32>
    %152 = arith.addf %150, %151 : vector<8x128xf32>
    %153 = arith.negf %152 : vector<8x128xf32>
    %154 = math.exp %153 : vector<8x128xf32>
    %cst_31 = arith.constant 1.000000e+00 : f32
    %155 = vector.broadcast %cst_31 : f32 to vector<8x128xf32>
    %156 = arith.addf %155, %154 : vector<8x128xf32>
    %157 = arith.divf %155, %156 : vector<8x128xf32>
    %158 = vector.extract_strided_slice %157 {offsets = [0, 0], sizes = [8, 32], strides = [1, 1]} : vector<8x128xf32> to vector<8x32xf32>
    %159 = vector.extract_strided_slice %157 {offsets = [0, 32], sizes = [8, 32], strides = [1, 1]} : vector<8x128xf32> to vector<8x32xf32>
    %160 = vector.extract_strided_slice %157 {offsets = [0, 64], sizes = [8, 32], strides = [1, 1]} : vector<8x128xf32> to vector<8x32xf32>
    %cst_32 = arith.constant 2.000000e+00 : f32
    %161 = vector.broadcast %cst_32 : f32 to vector<8x32xf32>
    %162 = arith.mulf %161, %160 : vector<8x32xf32>
    %cst_33 = arith.constant 1.000000e+00 : f32
    %163 = vector.broadcast %cst_33 : f32 to vector<8x32xf32>
    %164 = arith.subf %162, %163 : vector<8x32xf32>
    %165 = vector.extract_strided_slice %157 {offsets = [0, 96], sizes = [8, 32], strides = [1, 1]} : vector<8x128xf32> to vector<8x32xf32>
    %166 = arith.mulf %159, %105 : vector<8x32xf32>
    %167 = arith.mulf %158, %164 : vector<8x32xf32>
    %168 = arith.addf %166, %167 : vector<8x32xf32>
    %169 = math.tanh %168 : vector<8x32xf32>
    %170 = arith.mulf %165, %169 : vector<8x32xf32>
    %171 = vector.extract_strided_slice %8 {offsets = [24, 0], sizes = [8, 256], strides = [1, 1]} : vector<56x256xf32> to vector<8x256xf32>
    %cst_34 = arith.constant dense<0.000000e+00> : vector<8x256xf32>
    %172 = tpu.matmul %170, %1, %cst_34 {dimension_numbers = #tpu.dot_dimension_numbers<[1], [0], [0], [1], [0, 0, 1, 1], [], []>} : vector<8x32xf32>, vector<32x256xf32>, vector<8x256xf32> -> vector<8x256xf32>
    %173 = vector.extract_strided_slice %171 {offsets = [0, 128], sizes = [8, 4], strides = [1, 1]} : vector<8x256xf32> to vector<8x4xf32>
    %174 = vector.extract_strided_slice %172 {offsets = [0, 128], sizes = [8, 4], strides = [1, 1]} : vector<8x256xf32> to vector<8x4xf32>
    %175 = arith.addf %173, %174 : vector<8x4xf32>
    %cst_35 = arith.constant 0.000000e+00 : f32
    %176 = vector.broadcast %cst_35 : f32 to vector<8x4xf32>
    %177 = arith.maximumf %175, %176 : vector<8x4xf32>
    %cst_36 = arith.constant dense<0xFF800000> : vector<8xf32>
    %178 = vector.multi_reduction <maximumf>, %177, %cst_36 [1] : vector<8x4xf32> to vector<8xf32>
    %179 = vector.shape_cast %178 : vector<8xf32> to vector<8x1xf32>
    %180 = vector.broadcast %179 : vector<8x1xf32> to vector<8x4xf32>
    %181 = arith.subf %177, %180 : vector<8x4xf32>
    %182 = math.exp %181 : vector<8x4xf32>
    %cst_37 = arith.constant dense<0.000000e+00> : vector<8xf32>
    %183 = vector.multi_reduction <add>, %182, %cst_37 [1] : vector<8x4xf32> to vector<8xf32>
    %184 = vector.shape_cast %183 : vector<8xf32> to vector<8x1xf32>
    %185 = tpu.reciprocal %184 {approx = true} : vector<8x1xf32> -> vector<8x1xf32>
    %186 = vector.broadcast %185 : vector<8x1xf32> to vector<8x4xf32>
    %187 = arith.mulf %182, %186 : vector<8x4xf32>
    %188 = vector.extract_strided_slice %187 {offsets = [0, 0], sizes = [8, 1], strides = [1, 1]} : vector<8x4xf32> to vector<8x1xf32>
    %189 = vector.extract_strided_slice %0 {offsets = [0, 0, 0], sizes = [1, 8, 32], strides = [1, 1, 1]} : vector<4x8x32xf32> to vector<1x8x32xf32>
    %190 = vector.shape_cast %189 : vector<1x8x32xf32> to vector<8x32xf32>
    %191 = vector.broadcast %188 : vector<8x1xf32> to vector<8x32xf32>
    %192 = arith.mulf %191, %190 : vector<8x32xf32>
    %193 = vector.extract_strided_slice %187 {offsets = [0, 1], sizes = [8, 1], strides = [1, 1]} : vector<8x4xf32> to vector<8x1xf32>
    %194 = vector.extract_strided_slice %0 {offsets = [1, 0, 0], sizes = [1, 8, 32], strides = [1, 1, 1]} : vector<4x8x32xf32> to vector<1x8x32xf32>
    %195 = vector.shape_cast %194 : vector<1x8x32xf32> to vector<8x32xf32>
    %196 = vector.broadcast %193 : vector<8x1xf32> to vector<8x32xf32>
    %197 = arith.mulf %196, %195 : vector<8x32xf32>
    %198 = arith.addf %192, %197 : vector<8x32xf32>
    %199 = vector.extract_strided_slice %187 {offsets = [0, 2], sizes = [8, 1], strides = [1, 1]} : vector<8x4xf32> to vector<8x1xf32>
    %200 = vector.extract_strided_slice %0 {offsets = [2, 0, 0], sizes = [1, 8, 32], strides = [1, 1, 1]} : vector<4x8x32xf32> to vector<1x8x32xf32>
    %201 = vector.shape_cast %200 : vector<1x8x32xf32> to vector<8x32xf32>
    %202 = vector.broadcast %199 : vector<8x1xf32> to vector<8x32xf32>
    %203 = arith.mulf %202, %201 : vector<8x32xf32>
    %204 = arith.addf %198, %203 : vector<8x32xf32>
    %205 = vector.extract_strided_slice %187 {offsets = [0, 3], sizes = [8, 1], strides = [1, 1]} : vector<8x4xf32> to vector<8x1xf32>
    %206 = vector.extract_strided_slice %0 {offsets = [3, 0, 0], sizes = [1, 8, 32], strides = [1, 1, 1]} : vector<4x8x32xf32> to vector<1x8x32xf32>
    %207 = vector.shape_cast %206 : vector<1x8x32xf32> to vector<8x32xf32>
    %208 = vector.broadcast %205 : vector<8x1xf32> to vector<8x32xf32>
    %209 = arith.mulf %208, %207 : vector<8x32xf32>
    %210 = arith.addf %204, %209 : vector<8x32xf32>
    %211 = vector.extract_strided_slice %171 {offsets = [0, 0], sizes = [8, 128], strides = [1, 1]} : vector<8x256xf32> to vector<8x128xf32>
    %212 = vector.extract_strided_slice %172 {offsets = [0, 0], sizes = [8, 128], strides = [1, 1]} : vector<8x256xf32> to vector<8x128xf32>
    %213 = arith.addf %211, %212 : vector<8x128xf32>
    %cst_38 = arith.constant dense<0.000000e+00> : vector<8x128xf32>
    %214 = tpu.matmul %210, %2, %cst_38 {dimension_numbers = #tpu.dot_dimension_numbers<[1], [0], [0], [1], [0, 0, 1, 1], [], []>} : vector<8x32xf32>, vector<32x128xf32>, vector<8x128xf32> -> vector<8x128xf32>
    %215 = arith.addf %213, %214 : vector<8x128xf32>
    %216 = arith.negf %215 : vector<8x128xf32>
    %217 = math.exp %216 : vector<8x128xf32>
    %cst_39 = arith.constant 1.000000e+00 : f32
    %218 = vector.broadcast %cst_39 : f32 to vector<8x128xf32>
    %219 = arith.addf %218, %217 : vector<8x128xf32>
    %220 = arith.divf %218, %219 : vector<8x128xf32>
    %221 = vector.extract_strided_slice %220 {offsets = [0, 0], sizes = [8, 32], strides = [1, 1]} : vector<8x128xf32> to vector<8x32xf32>
    %222 = vector.extract_strided_slice %220 {offsets = [0, 32], sizes = [8, 32], strides = [1, 1]} : vector<8x128xf32> to vector<8x32xf32>
    %223 = vector.extract_strided_slice %220 {offsets = [0, 64], sizes = [8, 32], strides = [1, 1]} : vector<8x128xf32> to vector<8x32xf32>
    %cst_40 = arith.constant 2.000000e+00 : f32
    %224 = vector.broadcast %cst_40 : f32 to vector<8x32xf32>
    %225 = arith.mulf %224, %223 : vector<8x32xf32>
    %cst_41 = arith.constant 1.000000e+00 : f32
    %226 = vector.broadcast %cst_41 : f32 to vector<8x32xf32>
    %227 = arith.subf %225, %226 : vector<8x32xf32>
    %228 = vector.extract_strided_slice %220 {offsets = [0, 96], sizes = [8, 32], strides = [1, 1]} : vector<8x128xf32> to vector<8x32xf32>
    %229 = arith.mulf %222, %168 : vector<8x32xf32>
    %230 = arith.mulf %221, %227 : vector<8x32xf32>
    %231 = arith.addf %229, %230 : vector<8x32xf32>
    %232 = math.tanh %231 : vector<8x32xf32>
    %233 = arith.mulf %228, %232 : vector<8x32xf32>
    %234 = vector.extract_strided_slice %8 {offsets = [32, 0], sizes = [8, 256], strides = [1, 1]} : vector<56x256xf32> to vector<8x256xf32>
    %cst_42 = arith.constant dense<0.000000e+00> : vector<8x256xf32>
    %235 = tpu.matmul %233, %1, %cst_42 {dimension_numbers = #tpu.dot_dimension_numbers<[1], [0], [0], [1], [0, 0, 1, 1], [], []>} : vector<8x32xf32>, vector<32x256xf32>, vector<8x256xf32> -> vector<8x256xf32>
    %236 = vector.extract_strided_slice %234 {offsets = [0, 128], sizes = [8, 4], strides = [1, 1]} : vector<8x256xf32> to vector<8x4xf32>
    %237 = vector.extract_strided_slice %235 {offsets = [0, 128], sizes = [8, 4], strides = [1, 1]} : vector<8x256xf32> to vector<8x4xf32>
    %238 = arith.addf %236, %237 : vector<8x4xf32>
    %cst_43 = arith.constant 0.000000e+00 : f32
    %239 = vector.broadcast %cst_43 : f32 to vector<8x4xf32>
    %240 = arith.maximumf %238, %239 : vector<8x4xf32>
    %cst_44 = arith.constant dense<0xFF800000> : vector<8xf32>
    %241 = vector.multi_reduction <maximumf>, %240, %cst_44 [1] : vector<8x4xf32> to vector<8xf32>
    %242 = vector.shape_cast %241 : vector<8xf32> to vector<8x1xf32>
    %243 = vector.broadcast %242 : vector<8x1xf32> to vector<8x4xf32>
    %244 = arith.subf %240, %243 : vector<8x4xf32>
    %245 = math.exp %244 : vector<8x4xf32>
    %cst_45 = arith.constant dense<0.000000e+00> : vector<8xf32>
    %246 = vector.multi_reduction <add>, %245, %cst_45 [1] : vector<8x4xf32> to vector<8xf32>
    %247 = vector.shape_cast %246 : vector<8xf32> to vector<8x1xf32>
    %248 = tpu.reciprocal %247 {approx = true} : vector<8x1xf32> -> vector<8x1xf32>
    %249 = vector.broadcast %248 : vector<8x1xf32> to vector<8x4xf32>
    %250 = arith.mulf %245, %249 : vector<8x4xf32>
    %251 = vector.extract_strided_slice %250 {offsets = [0, 0], sizes = [8, 1], strides = [1, 1]} : vector<8x4xf32> to vector<8x1xf32>
    %252 = vector.extract_strided_slice %0 {offsets = [0, 0, 0], sizes = [1, 8, 32], strides = [1, 1, 1]} : vector<4x8x32xf32> to vector<1x8x32xf32>
    %253 = vector.shape_cast %252 : vector<1x8x32xf32> to vector<8x32xf32>
    %254 = vector.broadcast %251 : vector<8x1xf32> to vector<8x32xf32>
    %255 = arith.mulf %254, %253 : vector<8x32xf32>
    %256 = vector.extract_strided_slice %250 {offsets = [0, 1], sizes = [8, 1], strides = [1, 1]} : vector<8x4xf32> to vector<8x1xf32>
    %257 = vector.extract_strided_slice %0 {offsets = [1, 0, 0], sizes = [1, 8, 32], strides = [1, 1, 1]} : vector<4x8x32xf32> to vector<1x8x32xf32>
    %258 = vector.shape_cast %257 : vector<1x8x32xf32> to vector<8x32xf32>
    %259 = vector.broadcast %256 : vector<8x1xf32> to vector<8x32xf32>
    %260 = arith.mulf %259, %258 : vector<8x32xf32>
    %261 = arith.addf %255, %260 : vector<8x32xf32>
    %262 = vector.extract_strided_slice %250 {offsets = [0, 2], sizes = [8, 1], strides = [1, 1]} : vector<8x4xf32> to vector<8x1xf32>
    %263 = vector.extract_strided_slice %0 {offsets = [2, 0, 0], sizes = [1, 8, 32], strides = [1, 1, 1]} : vector<4x8x32xf32> to vector<1x8x32xf32>
    %264 = vector.shape_cast %263 : vector<1x8x32xf32> to vector<8x32xf32>
    %265 = vector.broadcast %262 : vector<8x1xf32> to vector<8x32xf32>
    %266 = arith.mulf %265, %264 : vector<8x32xf32>
    %267 = arith.addf %261, %266 : vector<8x32xf32>
    %268 = vector.extract_strided_slice %250 {offsets = [0, 3], sizes = [8, 1], strides = [1, 1]} : vector<8x4xf32> to vector<8x1xf32>
    %269 = vector.extract_strided_slice %0 {offsets = [3, 0, 0], sizes = [1, 8, 32], strides = [1, 1, 1]} : vector<4x8x32xf32> to vector<1x8x32xf32>
    %270 = vector.shape_cast %269 : vector<1x8x32xf32> to vector<8x32xf32>
    %271 = vector.broadcast %268 : vector<8x1xf32> to vector<8x32xf32>
    %272 = arith.mulf %271, %270 : vector<8x32xf32>
    %273 = arith.addf %267, %272 : vector<8x32xf32>
    %274 = vector.extract_strided_slice %234 {offsets = [0, 0], sizes = [8, 128], strides = [1, 1]} : vector<8x256xf32> to vector<8x128xf32>
    %275 = vector.extract_strided_slice %235 {offsets = [0, 0], sizes = [8, 128], strides = [1, 1]} : vector<8x256xf32> to vector<8x128xf32>
    %276 = arith.addf %274, %275 : vector<8x128xf32>
    %cst_46 = arith.constant dense<0.000000e+00> : vector<8x128xf32>
    %277 = tpu.matmul %273, %2, %cst_46 {dimension_numbers = #tpu.dot_dimension_numbers<[1], [0], [0], [1], [0, 0, 1, 1], [], []>} : vector<8x32xf32>, vector<32x128xf32>, vector<8x128xf32> -> vector<8x128xf32>
    %278 = arith.addf %276, %277 : vector<8x128xf32>
    %279 = arith.negf %278 : vector<8x128xf32>
    %280 = math.exp %279 : vector<8x128xf32>
    %cst_47 = arith.constant 1.000000e+00 : f32
    %281 = vector.broadcast %cst_47 : f32 to vector<8x128xf32>
    %282 = arith.addf %281, %280 : vector<8x128xf32>
    %283 = arith.divf %281, %282 : vector<8x128xf32>
    %284 = vector.extract_strided_slice %283 {offsets = [0, 0], sizes = [8, 32], strides = [1, 1]} : vector<8x128xf32> to vector<8x32xf32>
    %285 = vector.extract_strided_slice %283 {offsets = [0, 32], sizes = [8, 32], strides = [1, 1]} : vector<8x128xf32> to vector<8x32xf32>
    %286 = vector.extract_strided_slice %283 {offsets = [0, 64], sizes = [8, 32], strides = [1, 1]} : vector<8x128xf32> to vector<8x32xf32>
    %cst_48 = arith.constant 2.000000e+00 : f32
    %287 = vector.broadcast %cst_48 : f32 to vector<8x32xf32>
    %288 = arith.mulf %287, %286 : vector<8x32xf32>
    %cst_49 = arith.constant 1.000000e+00 : f32
    %289 = vector.broadcast %cst_49 : f32 to vector<8x32xf32>
    %290 = arith.subf %288, %289 : vector<8x32xf32>
    %291 = vector.extract_strided_slice %283 {offsets = [0, 96], sizes = [8, 32], strides = [1, 1]} : vector<8x128xf32> to vector<8x32xf32>
    %292 = arith.mulf %285, %231 : vector<8x32xf32>
    %293 = arith.mulf %284, %290 : vector<8x32xf32>
    %294 = arith.addf %292, %293 : vector<8x32xf32>
    %295 = math.tanh %294 : vector<8x32xf32>
    %296 = arith.mulf %291, %295 : vector<8x32xf32>
    %297 = vector.extract_strided_slice %8 {offsets = [40, 0], sizes = [8, 256], strides = [1, 1]} : vector<56x256xf32> to vector<8x256xf32>
    %cst_50 = arith.constant dense<0.000000e+00> : vector<8x256xf32>
    %298 = tpu.matmul %296, %1, %cst_50 {dimension_numbers = #tpu.dot_dimension_numbers<[1], [0], [0], [1], [0, 0, 1, 1], [], []>} : vector<8x32xf32>, vector<32x256xf32>, vector<8x256xf32> -> vector<8x256xf32>
    %299 = vector.extract_strided_slice %297 {offsets = [0, 128], sizes = [8, 4], strides = [1, 1]} : vector<8x256xf32> to vector<8x4xf32>
    %300 = vector.extract_strided_slice %298 {offsets = [0, 128], sizes = [8, 4], strides = [1, 1]} : vector<8x256xf32> to vector<8x4xf32>
    %301 = arith.addf %299, %300 : vector<8x4xf32>
    %cst_51 = arith.constant 0.000000e+00 : f32
    %302 = vector.broadcast %cst_51 : f32 to vector<8x4xf32>
    %303 = arith.maximumf %301, %302 : vector<8x4xf32>
    %cst_52 = arith.constant dense<0xFF800000> : vector<8xf32>
    %304 = vector.multi_reduction <maximumf>, %303, %cst_52 [1] : vector<8x4xf32> to vector<8xf32>
    %305 = vector.shape_cast %304 : vector<8xf32> to vector<8x1xf32>
    %306 = vector.broadcast %305 : vector<8x1xf32> to vector<8x4xf32>
    %307 = arith.subf %303, %306 : vector<8x4xf32>
    %308 = math.exp %307 : vector<8x4xf32>
    %cst_53 = arith.constant dense<0.000000e+00> : vector<8xf32>
    %309 = vector.multi_reduction <add>, %308, %cst_53 [1] : vector<8x4xf32> to vector<8xf32>
    %310 = vector.shape_cast %309 : vector<8xf32> to vector<8x1xf32>
    %311 = tpu.reciprocal %310 {approx = true} : vector<8x1xf32> -> vector<8x1xf32>
    %312 = vector.broadcast %311 : vector<8x1xf32> to vector<8x4xf32>
    %313 = arith.mulf %308, %312 : vector<8x4xf32>
    %314 = vector.extract_strided_slice %313 {offsets = [0, 0], sizes = [8, 1], strides = [1, 1]} : vector<8x4xf32> to vector<8x1xf32>
    %315 = vector.extract_strided_slice %0 {offsets = [0, 0, 0], sizes = [1, 8, 32], strides = [1, 1, 1]} : vector<4x8x32xf32> to vector<1x8x32xf32>
    %316 = vector.shape_cast %315 : vector<1x8x32xf32> to vector<8x32xf32>
    %317 = vector.broadcast %314 : vector<8x1xf32> to vector<8x32xf32>
    %318 = arith.mulf %317, %316 : vector<8x32xf32>
    %319 = vector.extract_strided_slice %313 {offsets = [0, 1], sizes = [8, 1], strides = [1, 1]} : vector<8x4xf32> to vector<8x1xf32>
    %320 = vector.extract_strided_slice %0 {offsets = [1, 0, 0], sizes = [1, 8, 32], strides = [1, 1, 1]} : vector<4x8x32xf32> to vector<1x8x32xf32>
    %321 = vector.shape_cast %320 : vector<1x8x32xf32> to vector<8x32xf32>
    %322 = vector.broadcast %319 : vector<8x1xf32> to vector<8x32xf32>
    %323 = arith.mulf %322, %321 : vector<8x32xf32>
    %324 = arith.addf %318, %323 : vector<8x32xf32>
    %325 = vector.extract_strided_slice %313 {offsets = [0, 2], sizes = [8, 1], strides = [1, 1]} : vector<8x4xf32> to vector<8x1xf32>
    %326 = vector.extract_strided_slice %0 {offsets = [2, 0, 0], sizes = [1, 8, 32], strides = [1, 1, 1]} : vector<4x8x32xf32> to vector<1x8x32xf32>
    %327 = vector.shape_cast %326 : vector<1x8x32xf32> to vector<8x32xf32>
    %328 = vector.broadcast %325 : vector<8x1xf32> to vector<8x32xf32>
    %329 = arith.mulf %328, %327 : vector<8x32xf32>
    %330 = arith.addf %324, %329 : vector<8x32xf32>
    %331 = vector.extract_strided_slice %313 {offsets = [0, 3], sizes = [8, 1], strides = [1, 1]} : vector<8x4xf32> to vector<8x1xf32>
    %332 = vector.extract_strided_slice %0 {offsets = [3, 0, 0], sizes = [1, 8, 32], strides = [1, 1, 1]} : vector<4x8x32xf32> to vector<1x8x32xf32>
    %333 = vector.shape_cast %332 : vector<1x8x32xf32> to vector<8x32xf32>
    %334 = vector.broadcast %331 : vector<8x1xf32> to vector<8x32xf32>
    %335 = arith.mulf %334, %333 : vector<8x32xf32>
    %336 = arith.addf %330, %335 : vector<8x32xf32>
    %337 = vector.extract_strided_slice %297 {offsets = [0, 0], sizes = [8, 128], strides = [1, 1]} : vector<8x256xf32> to vector<8x128xf32>
    %338 = vector.extract_strided_slice %298 {offsets = [0, 0], sizes = [8, 128], strides = [1, 1]} : vector<8x256xf32> to vector<8x128xf32>
    %339 = arith.addf %337, %338 : vector<8x128xf32>
    %cst_54 = arith.constant dense<0.000000e+00> : vector<8x128xf32>
    %340 = tpu.matmul %336, %2, %cst_54 {dimension_numbers = #tpu.dot_dimension_numbers<[1], [0], [0], [1], [0, 0, 1, 1], [], []>} : vector<8x32xf32>, vector<32x128xf32>, vector<8x128xf32> -> vector<8x128xf32>
    %341 = arith.addf %339, %340 : vector<8x128xf32>
    %342 = arith.negf %341 : vector<8x128xf32>
    %343 = math.exp %342 : vector<8x128xf32>
    %cst_55 = arith.constant 1.000000e+00 : f32
    %344 = vector.broadcast %cst_55 : f32 to vector<8x128xf32>
    %345 = arith.addf %344, %343 : vector<8x128xf32>
    %346 = arith.divf %344, %345 : vector<8x128xf32>
    %347 = vector.extract_strided_slice %346 {offsets = [0, 0], sizes = [8, 32], strides = [1, 1]} : vector<8x128xf32> to vector<8x32xf32>
    %348 = vector.extract_strided_slice %346 {offsets = [0, 32], sizes = [8, 32], strides = [1, 1]} : vector<8x128xf32> to vector<8x32xf32>
    %349 = vector.extract_strided_slice %346 {offsets = [0, 64], sizes = [8, 32], strides = [1, 1]} : vector<8x128xf32> to vector<8x32xf32>
    %cst_56 = arith.constant 2.000000e+00 : f32
    %350 = vector.broadcast %cst_56 : f32 to vector<8x32xf32>
    %351 = arith.mulf %350, %349 : vector<8x32xf32>
    %cst_57 = arith.constant 1.000000e+00 : f32
    %352 = vector.broadcast %cst_57 : f32 to vector<8x32xf32>
    %353 = arith.subf %351, %352 : vector<8x32xf32>
    %354 = vector.extract_strided_slice %346 {offsets = [0, 96], sizes = [8, 32], strides = [1, 1]} : vector<8x128xf32> to vector<8x32xf32>
    %355 = arith.mulf %348, %294 : vector<8x32xf32>
    %356 = arith.mulf %347, %353 : vector<8x32xf32>
    %357 = arith.addf %355, %356 : vector<8x32xf32>
    %358 = math.tanh %357 : vector<8x32xf32>
    %359 = arith.mulf %354, %358 : vector<8x32xf32>
    %360 = vector.extract_strided_slice %8 {offsets = [48, 0], sizes = [8, 256], strides = [1, 1]} : vector<56x256xf32> to vector<8x256xf32>
    %cst_58 = arith.constant dense<0.000000e+00> : vector<8x256xf32>
    %361 = tpu.matmul %359, %1, %cst_58 {dimension_numbers = #tpu.dot_dimension_numbers<[1], [0], [0], [1], [0, 0, 1, 1], [], []>} : vector<8x32xf32>, vector<32x256xf32>, vector<8x256xf32> -> vector<8x256xf32>
    %362 = vector.extract_strided_slice %360 {offsets = [0, 128], sizes = [8, 4], strides = [1, 1]} : vector<8x256xf32> to vector<8x4xf32>
    %363 = vector.extract_strided_slice %361 {offsets = [0, 128], sizes = [8, 4], strides = [1, 1]} : vector<8x256xf32> to vector<8x4xf32>
    %364 = arith.addf %362, %363 : vector<8x4xf32>
    %cst_59 = arith.constant 0.000000e+00 : f32
    %365 = vector.broadcast %cst_59 : f32 to vector<8x4xf32>
    %366 = arith.maximumf %364, %365 : vector<8x4xf32>
    %cst_60 = arith.constant dense<0xFF800000> : vector<8xf32>
    %367 = vector.multi_reduction <maximumf>, %366, %cst_60 [1] : vector<8x4xf32> to vector<8xf32>
    %368 = vector.shape_cast %367 : vector<8xf32> to vector<8x1xf32>
    %369 = vector.broadcast %368 : vector<8x1xf32> to vector<8x4xf32>
    %370 = arith.subf %366, %369 : vector<8x4xf32>
    %371 = math.exp %370 : vector<8x4xf32>
    %cst_61 = arith.constant dense<0.000000e+00> : vector<8xf32>
    %372 = vector.multi_reduction <add>, %371, %cst_61 [1] : vector<8x4xf32> to vector<8xf32>
    %373 = vector.shape_cast %372 : vector<8xf32> to vector<8x1xf32>
    %374 = tpu.reciprocal %373 {approx = true} : vector<8x1xf32> -> vector<8x1xf32>
    %375 = vector.broadcast %374 : vector<8x1xf32> to vector<8x4xf32>
    %376 = arith.mulf %371, %375 : vector<8x4xf32>
    %377 = vector.extract_strided_slice %376 {offsets = [0, 0], sizes = [8, 1], strides = [1, 1]} : vector<8x4xf32> to vector<8x1xf32>
    %378 = vector.extract_strided_slice %0 {offsets = [0, 0, 0], sizes = [1, 8, 32], strides = [1, 1, 1]} : vector<4x8x32xf32> to vector<1x8x32xf32>
    %379 = vector.shape_cast %378 : vector<1x8x32xf32> to vector<8x32xf32>
    %380 = vector.broadcast %377 : vector<8x1xf32> to vector<8x32xf32>
    %381 = arith.mulf %380, %379 : vector<8x32xf32>
    %382 = vector.extract_strided_slice %376 {offsets = [0, 1], sizes = [8, 1], strides = [1, 1]} : vector<8x4xf32> to vector<8x1xf32>
    %383 = vector.extract_strided_slice %0 {offsets = [1, 0, 0], sizes = [1, 8, 32], strides = [1, 1, 1]} : vector<4x8x32xf32> to vector<1x8x32xf32>
    %384 = vector.shape_cast %383 : vector<1x8x32xf32> to vector<8x32xf32>
    %385 = vector.broadcast %382 : vector<8x1xf32> to vector<8x32xf32>
    %386 = arith.mulf %385, %384 : vector<8x32xf32>
    %387 = arith.addf %381, %386 : vector<8x32xf32>
    %388 = vector.extract_strided_slice %376 {offsets = [0, 2], sizes = [8, 1], strides = [1, 1]} : vector<8x4xf32> to vector<8x1xf32>
    %389 = vector.extract_strided_slice %0 {offsets = [2, 0, 0], sizes = [1, 8, 32], strides = [1, 1, 1]} : vector<4x8x32xf32> to vector<1x8x32xf32>
    %390 = vector.shape_cast %389 : vector<1x8x32xf32> to vector<8x32xf32>
    %391 = vector.broadcast %388 : vector<8x1xf32> to vector<8x32xf32>
    %392 = arith.mulf %391, %390 : vector<8x32xf32>
    %393 = arith.addf %387, %392 : vector<8x32xf32>
    %394 = vector.extract_strided_slice %376 {offsets = [0, 3], sizes = [8, 1], strides = [1, 1]} : vector<8x4xf32> to vector<8x1xf32>
    %395 = vector.extract_strided_slice %0 {offsets = [3, 0, 0], sizes = [1, 8, 32], strides = [1, 1, 1]} : vector<4x8x32xf32> to vector<1x8x32xf32>
    %396 = vector.shape_cast %395 : vector<1x8x32xf32> to vector<8x32xf32>
    %397 = vector.broadcast %394 : vector<8x1xf32> to vector<8x32xf32>
    %398 = arith.mulf %397, %396 : vector<8x32xf32>
    %399 = arith.addf %393, %398 : vector<8x32xf32>
    %400 = vector.extract_strided_slice %360 {offsets = [0, 0], sizes = [8, 128], strides = [1, 1]} : vector<8x256xf32> to vector<8x128xf32>
    %401 = vector.extract_strided_slice %361 {offsets = [0, 0], sizes = [8, 128], strides = [1, 1]} : vector<8x256xf32> to vector<8x128xf32>
    %402 = arith.addf %400, %401 : vector<8x128xf32>
    %cst_62 = arith.constant dense<0.000000e+00> : vector<8x128xf32>
    %403 = tpu.matmul %399, %2, %cst_62 {dimension_numbers = #tpu.dot_dimension_numbers<[1], [0], [0], [1], [0, 0, 1, 1], [], []>} : vector<8x32xf32>, vector<32x128xf32>, vector<8x128xf32> -> vector<8x128xf32>
    %404 = arith.addf %402, %403 : vector<8x128xf32>
    %405 = arith.negf %404 : vector<8x128xf32>
    %406 = math.exp %405 : vector<8x128xf32>
    %cst_63 = arith.constant 1.000000e+00 : f32
    %407 = vector.broadcast %cst_63 : f32 to vector<8x128xf32>
    %408 = arith.addf %407, %406 : vector<8x128xf32>
    %409 = arith.divf %407, %408 : vector<8x128xf32>
    %410 = vector.extract_strided_slice %409 {offsets = [0, 0], sizes = [8, 32], strides = [1, 1]} : vector<8x128xf32> to vector<8x32xf32>
    %411 = vector.extract_strided_slice %409 {offsets = [0, 32], sizes = [8, 32], strides = [1, 1]} : vector<8x128xf32> to vector<8x32xf32>
    %412 = vector.extract_strided_slice %409 {offsets = [0, 64], sizes = [8, 32], strides = [1, 1]} : vector<8x128xf32> to vector<8x32xf32>
    %cst_64 = arith.constant 2.000000e+00 : f32
    %413 = vector.broadcast %cst_64 : f32 to vector<8x32xf32>
    %414 = arith.mulf %413, %412 : vector<8x32xf32>
    %cst_65 = arith.constant 1.000000e+00 : f32
    %415 = vector.broadcast %cst_65 : f32 to vector<8x32xf32>
    %416 = arith.subf %414, %415 : vector<8x32xf32>
    %417 = vector.extract_strided_slice %409 {offsets = [0, 96], sizes = [8, 32], strides = [1, 1]} : vector<8x128xf32> to vector<8x32xf32>
    %418 = arith.mulf %411, %357 : vector<8x32xf32>
    %419 = arith.mulf %410, %416 : vector<8x32xf32>
    %420 = arith.addf %418, %419 : vector<8x32xf32>
    %421 = math.tanh %420 : vector<8x32xf32>
    %422 = arith.mulf %417, %421 : vector<8x32xf32>
    %423 = tpu.concatenate %44, %107, %170, %233, %296, %359, %422 in 0 : vector<8x32xf32>, vector<8x32xf32>, vector<8x32xf32>, vector<8x32xf32>, vector<8x32xf32>, vector<8x32xf32>, vector<8x32xf32> -> vector<56x32xf32>
    %c0_66 = arith.constant 0 : index
    %c0_67 = arith.constant 0 : index
    %424 = vector.load %arg6[%c0_66, %c0_67] : memref<32x128xf32, #tpu.memory_space<vmem>>, vector<32x128xf32>
    %cst_68 = arith.constant dense<0.000000e+00> : vector<56x128xf32>
    %425 = tpu.matmul %423, %424, %cst_68 {dimension_numbers = #tpu.dot_dimension_numbers<[1], [0], [0], [1], [0, 0, 1, 1], [], []>} : vector<56x32xf32>, vector<32x128xf32>, vector<56x128xf32> -> vector<56x128xf32>
    %c0_69 = arith.constant 0 : index
    %c0_70 = arith.constant 0 : index
    %426 = vector.load %arg7[%c0_69, %c0_70] : memref<1x128xf32, #tpu.memory_space<vmem>>, vector<1x128xf32>
    %427 = vector.broadcast %426 : vector<1x128xf32> to vector<56x128xf32>
    %428 = arith.addf %425, %427 : vector<56x128xf32>
    %c0_71 = arith.constant 0 : index
    %c0_72 = arith.constant 0 : index
    %429 = vector.load %arg8[%c0_71, %c0_72] : memref<56x128xf32, #tpu.memory_space<vmem>>, vector<56x128xf32>
    tpu.vector_store %arg8[%c0_71, %c0_72], %428 {strides = array<i32>} : memref<56x128xf32, #tpu.memory_space<vmem>>, vector<56x128xf32>,
    return
  }
}

</mosaic_0001>

<llo_original>
// kernel: tpu_custom_call.1
$region0: #{tpu_custom_call.1}
  #allocation0 [shape = 'u32[]', space=smem, size = 0x4, offset = 0x4, fixed_abs, tag = 'smem constant byte address 0x4 - core index']
  #allocation1 [shape = 'u32[144,128]{1,0:T(1,128)}', space=vmem, size = 0x12000, scoped, tag = 'internal scratch']
  %s0 = inlined_call_operand.vmem [shape: f32[56,32], index: 0, kind: input, shape index: {}]
  %s1 = inlined_call_operand.hbm [shape: f32[4,8,32], index: 1, kind: input, shape index: {}]
  %s2 = inlined_call_operand.vmem [shape: f32[32,256], index: 2, kind: input, shape index: {}]
  %s3 = inlined_call_operand.vmem [shape: f32[1,256], index: 3, kind: input, shape index: {}]
  %s4 = inlined_call_operand.hbm [shape: f32[32,256], index: 4, kind: input, shape index: {}]
  %s5 = inlined_call_operand.vmem [shape: f32[32,128], index: 5, kind: input, shape index: {}]
  %s6 = inlined_call_operand.hbm [shape: f32[32,128], index: 6, kind: input, shape index: {}]
  %s7 = inlined_call_operand.vmem [shape: f32[1,128], index: 7, kind: input, shape index: {}]
  %s8 = inlined_call_operand.hbm [shape: f32[56,128], index: 8, kind: output, shape index: {}]
  %s9 = sld [smem:[#allocation0]]
  $region54: #{tpu_custom_call.1} parent=0
    _
  %s11 = ssub.s32 1, %s9
  %s12 = scalar_select 0, %s11, %s9
  $region1: #{tpu_custom_call.1} parent=0
    #allocation2 [shape = 'u8[16384]{0}', space=vmem, size = 0x4000, scoped, tag = 'input window, operand 1, single buffered']
    #allocation3 [shape = 's32[1]{0}', space=sflag, size = 0x4, scoped, tag = 'scoped memory for tpu_custom_call.1']
    #allocation4 [shape = 's32[1]{0}', space=sflag, size = 0x4, scoped, tag = 'scoped memory for tpu_custom_call.1']
    #allocation5 [shape = 'u8[32768]{0}', space=vmem, size = 0x8000, scoped, tag = 'input window, operand 4, single buffered']
    #allocation6 [shape = 's32[1]{0}', space=sflag, size = 0x4, scoped, tag = 'scoped memory for tpu_custom_call.1']
    #allocation7 [shape = 'u8[16384]{0}', space=vmem, size = 0x4000, scoped, tag = 'input window, operand 6, single buffered']
    #allocation8 [shape = 'u8[28672]{0}', space=vmem, size = 0x7000, scoped, tag = 'output window, operand 0, single buffered']
    %13 = vsyncpa [#allocation3], 0
    %14 = vsyncpa [#allocation6], 0
    %15 = vsyncpa [#allocation4], 0
    // Predicated region
    $region2: #{tpu_custom_call.1} parent=1 // pred_check
      _
    $region3: #{tpu_custom_call.1} parent=1 // pred_check_branch
      %17 = sbr.rel (0) target = $region5
    $region4: #{tpu_custom_call.1} parent=1 // pred_region
      _
    $region5: #{tpu_custom_call.1} parent=1 // pred_fallthru
      _
    // Predicated region
    $region6: #{tpu_custom_call.1} parent=1 // pred_check
      _
    $region7: #{tpu_custom_call.1} parent=1 // pred_check_branch
      %19 = sbr.rel (0) target = $region9
    $region8: #{tpu_custom_call.1} parent=1 // pred_region
      %s21 = ssub.s32 512, 512
      %22 = vsyncadd [#allocation3], %s21
      %s23 = sshll.u32 [#allocation2], 4
      %s24 = int_to_ptr.vmem [resolvable:$true] %s23
      %29 = dma.hbm_to_vmem [thread:$0]  %s1, 512, %s24, [#allocation3], 128, 128, 8
    $region9: #{tpu_custom_call.1} parent=1 // pred_fallthru
      _
    // Predicated region
    $region10: #{tpu_custom_call.1} parent=1 // pred_check
      _
    $region11: #{tpu_custom_call.1} parent=1 // pred_check_branch
      %31 = sbr.rel (0) target = $region13
    $region12: #{tpu_custom_call.1} parent=1 // pred_region
      _
    $region13: #{tpu_custom_call.1} parent=1 // pred_fallthru
      _
    // Predicated region
    $region14: #{tpu_custom_call.1} parent=1 // pred_check
      _
    $region15: #{tpu_custom_call.1} parent=1 // pred_check_branch
      %33 = sbr.rel (0) target = $region17
    $region16: #{tpu_custom_call.1} parent=1 // pred_region
      _
    $region17: #{tpu_custom_call.1} parent=1 // pred_fallthru
      _
    // Predicated region
    $region18: #{tpu_custom_call.1} parent=1 // pred_check
      _
    $region19: #{tpu_custom_call.1} parent=1 // pred_check_branch
      %35 = sbr.rel (0) target = $region21
    $region20: #{tpu_custom_call.1} parent=1 // pred_region
      %s37 = ssub.s32 1024, 1024
      %38 = vsyncadd [#allocation6], %s37
      %s39 = sshll.u32 [#allocation5], 4
      %s40 = int_to_ptr.vmem [resolvable:$true] %s39
      %45 = dma.hbm_to_vmem [thread:$0]  %s4, 1024, %s40, [#allocation6], 256, 256, 16
    $region21: #{tpu_custom_call.1} parent=1 // pred_fallthru
      _
    // Predicated region
    $region22: #{tpu_custom_call.1} parent=1 // pred_check
      _
    $region23: #{tpu_custom_call.1} parent=1 // pred_check_branch
      %47 = sbr.rel (0) target = $region25
    $region24: #{tpu_custom_call.1} parent=1 // pred_region
      _
    $region25: #{tpu_custom_call.1} parent=1 // pred_fallthru
      _
    // Predicated region
    $region26: #{tpu_custom_call.1} parent=1 // pred_check
      _
    $region27: #{tpu_custom_call.1} parent=1 // pred_check_branch
      %49 = sbr.rel (0) target = $region29
    $region28: #{tpu_custom_call.1} parent=1 // pred_region
      %s51 = ssub.s32 512, 512
      %52 = vsyncadd [#allocation6], %s51
      %s53 = sshll.u32 [#allocation7], 4
      %s54 = int_to_ptr.vmem [resolvable:$true] %s53
      %59 = dma.hbm_to_vmem [thread:$0]  %s6, 512, %s54, [#allocation6], 128, 128, 8
    $region29: #{tpu_custom_call.1} parent=1 // pred_fallthru
      _
    // Predicated region
    $region30: #{tpu_custom_call.1} parent=1 // pred_check
      _
    $region31: #{tpu_custom_call.1} parent=1 // pred_check_branch
      %61 = sbr.rel (0) target = $region33
    $region32: #{tpu_custom_call.1} parent=1 // pred_region
      _
    $region33: #{tpu_custom_call.1} parent=1 // pred_fallthru
      _
    // Predicated region
    $region34: #{tpu_custom_call.1} parent=1 // pred_check
      _
    $region35: #{tpu_custom_call.1} parent=1 // pred_check_branch
      %63 = sbr.rel (0) target = $region37
    $region36: #{tpu_custom_call.1} parent=1 // pred_region
      %64 = dma.done [#allocation3], 512
    $region37: #{tpu_custom_call.1} parent=1 // pred_fallthru
      _
    // Predicated region
    $region38: #{tpu_custom_call.1} parent=1 // pred_check
      _
    $region39: #{tpu_custom_call.1} parent=1 // pred_check_branch
      %66 = sbr.rel (0) target = $region41
    $region40: #{tpu_custom_call.1} parent=1 // pred_region
      %67 = dma.done [#allocation6], 1024
    $region41: #{tpu_custom_call.1} parent=1 // pred_fallthru
      _
    // Predicated region
    $region42: #{tpu_custom_call.1} parent=1 // pred_check
      _
    $region43: #{tpu_custom_call.1} parent=1 // pred_check_branch
      %69 = sbr.rel (0) target = $region45
    $region44: #{tpu_custom_call.1} parent=1 // pred_region
      %70 = dma.done [#allocation6], 512
    $region45: #{tpu_custom_call.1} parent=1 // pred_fallthru
      _
    %v71 = vld [vmem:[#allocation2] sm:$0xff]
    %v72 = vld [vmem:[#allocation2 + $0x8] sm:$0xff]
    %v73 = vld [vmem:[#allocation2 + $0x10] sm:$0xff]
    %v74 = vld [vmem:[#allocation2 + $0x18] sm:$0xff]
    %v75 = vld [vmem:[#allocation5] sm:$0xff]
    %v76 = vld [vmem:[#allocation5 + $0x8] sm:$0xff]
    %v77 = vld [vmem:[#allocation5 + $0x10] sm:$0xff]
    %v78 = vld [vmem:[#allocation5 + $0x18] sm:$0xff]
    %v79 = vld [vmem:[#allocation5 + $0x20] sm:$0xff]
    %v80 = vld [vmem:[#allocation5 + $0x28] sm:$0xff]
    %v81 = vld [vmem:[#allocation5 + $0x30] sm:$0xff]
    %v82 = vld [vmem:[#allocation5 + $0x38] sm:$0xff]
    %v83 = vld [vmem:[%s5] sm:$0xff]
    %v84 = vld [vmem:[%s5 + $0x8] sm:$0xff]
    %v85 = vld [vmem:[%s5 + $0x10] sm:$0xff]
    %v86 = vld [vmem:[%s5 + $0x18] sm:$0xff]
    %v87 = vld [vmem:[%s0] sm:$0xff]
    %v88 = vld [vmem:[%s0 + $0x8] sm:$0xff]
    %v89 = vld [vmem:[%s0 + $0x10] sm:$0xff]
    %v90 = vld [vmem:[%s0 + $0x18] sm:$0xff]
    %v91 = vld [vmem:[%s0 + $0x20] sm:$0xff]
    %v92 = vld [vmem:[%s0 + $0x28] sm:$0xff]
    %v93 = vld [vmem:[%s0 + $0x30] sm:$0xff]
    %v94 = vld [vmem:[%s2] sm:$0xff]
    %v95 = vld [vmem:[%s2 + $0x8] sm:$0xff]
    %v96 = vld [vmem:[%s2 + $0x10] sm:$0xff]
    %v97 = vld [vmem:[%s2 + $0x18] sm:$0xff]
    %v98 = vld [vmem:[%s2 + $0x20] sm:$0xff]
    %v99 = vld [vmem:[%s2 + $0x28] sm:$0xff]
    %v100 = vld [vmem:[%s2 + $0x30] sm:$0xff]
    %v101 = vld [vmem:[%s2 + $0x38] sm:$0xff]
    %v102 = vld [vmem:[%s3] sm:$0x3]
    %v104 = vlaneseq
    %v105 = vshrl.u32 %v104, 7
    %v106 = vsub.s32 0, %v105
    %v107 = vrot.slane %v102, %v106
    %v108 = vlaneseq
    %v109 = vshrl.u32 %v108, 7
    %v110 = vsub.s32 1, %v109
    %v111 = vrot.slane %v102, %v110
    %vm114 = vcmask 261120
    %v116 = vsel %vm114, %v87, 0
    %v119 = vsel %vm114, %v88, 0
    %v122 = vsel %vm114, %v89, 0
    %v125 = vsel %vm114, %v90, 0
    %v128 = vsel %vm114, %v91, 0
    %v131 = vsel %vm114, %v92, 0
    %v134 = vsel %vm114, %v93, 0
    %136 = vmatprep.subr.mxu0 %v95
    %137 = vmatpush1.msra.mxu0 %v94
    %138 = vmatprep.subr.mxu0 %v97
    %139 = vmatpush1.msra.mxu0 %v96
    %140 = vmatprep.subr.mxu0 %v99
    %141 = vmatpush1.msra.mxu0 %v98
    %142 = vmatprep.subr.mxu0 %v101
    %143 = vmatpush1.msra.mxu0 %v100
    %144 = vmatprep.subr.mxu0 0.0
    %145 = vmatpush1.msra.mxu0 0.0
    %146 = vmatprep.subr.mxu0 0.0
    %147 = vmatpush1.msra.mxu0 0.0
    %148 = vmatprep.subr.mxu0 0.0
    %149 = vmatpush1.msra.mxu0 0.0
    %150 = vmatprep.subr.mxu0 0.0
    %151 = vmatpush1.msra.mxu0 0.0
    %152 = vmatprep.subr.mxu0 0.0
    %153 = vmatpush1.msra.mxu0 0.0
    %154 = vmatprep.subr.mxu0 0.0
    %155 = vmatpush1.msra.mxu0 0.0
    %156 = vmatprep.subr.mxu0 0.0
    %157 = vmatpush1.msra.mxu0 0.0
    %158 = vmatprep.subr.mxu0 0.0
    %159 = vmatpush1.msra.mxu0 0.0
    %160 = vmatprep.subr.mxu0 0.0
    %161 = vmatpush1.msra.mxu0 0.0
    %162 = vmatprep.subr.mxu0 0.0
    %163 = vmatpush1.msra.mxu0 0.0
    %164 = vmatprep.subr.mxu0 0.0
    %165 = vmatpush1.msra.mxu0 0.0
    %166 = vmatprep.subr.mxu0 0.0
    %167 = vmatpush1.msra.mxu0 0.0
    %168 = vmatprep.subr.mxu0 0.0
    %169 = vmatpush1.msra.mxu0 0.0
    %170 = vmatprep.subr.mxu0 0.0
    %171 = vmatpush1.msra.mxu0 0.0
    %172 = vmatprep.subr.mxu0 0.0
    %173 = vmatpush1.msra.mxu0 0.0
    %174 = vmatprep.subr.mxu0 0.0
    %175 = vmatpush1.msra.mxu0 0.0
    %176 = vmatprep.subr.mxu0 0.0
    %177 = vmatpush1.msra.mxu0 0.0
    %178 = vmatprep.subr.mxu0 0.0
    %179 = vmatpush1.msra.mxu0 0.0
    %180 = vmatprep.subr.mxu0 0.0
    %181 = vmatpush1.msra.mxu0 0.0
    %182 = vmatprep.subr.mxu0 0.0
    %183 = vmatpush1.msra.mxu0 0.0
    %184 = vmatprep.subr.mxu0 0.0
    %185 = vmatpush1.msra.mxu0 0.0
    %186 = vmatprep.subr.mxu0 0.0
    %187 = vmatpush1.msra.mxu0 0.0
    %188 = vmatprep.subr.mxu0 0.0
    %189 = vmatpush1.msra.mxu0 0.0
    %190 = vmatprep.subr.mxu0 0.0
    %191 = vmatpush1.msra.mxu0 0.0
    %192 = vmatprep.subr.mxu0 0.0
    %193 = vmatpush1.msra.mxu0 0.0
    %194 = vmatprep.subr.mxu0 0.0
    %195 = vmatpush1.msra.mxu0 0.0
    %196 = vmatprep.subr.mxu0 0.0
    %197 = vmatpush1.msra.mxu0 0.0
    %198 = vmatprep.subr.mxu0 0.0
    %199 = vmatpush1.msra.mxu0 0.0
    %200 = vmatprep.mubr.f32.mxu0 0.0
    %201 = vmatmul.mubr.f32.gmra.mrb[0].mxu0 %v116
    %v202 = vpop.f32.mrb[0].mxu0
    %v203 = vadd.f32 %v107, %v202
    %v204 = vpop.f32.mrb[0].mxu0
    %205 = vmatprep.mubr.f32.mxu0 0.0
    %206 = vmatmul.mubr.f32.gmra.mrb[0].mxu0 %v119
    %v207 = vpop.f32.mrb[0].mxu0
    %v208 = vadd.f32 %v107, %v207
    %v209 = vpop.f32.mrb[0].mxu0
    %v210 = vadd.f32 %v111, %v209
    %211 = vmatprep.mubr.f32.mxu0 0.0
    %212 = vmatmul.mubr.f32.gmra.mrb[0].mxu0 %v122
    %v213 = vpop.f32.mrb[0].mxu0
    %v214 = vadd.f32 %v107, %v213
    %v215 = vpop.f32.mrb[0].mxu0
    %v216 = vadd.f32 %v111, %v215
    %217 = vmatprep.mubr.f32.mxu0 0.0
    %218 = vmatmul.mubr.f32.gmra.mrb[0].mxu0 %v125
    %v219 = vpop.f32.mrb[0].mxu0
    %v220 = vadd.f32 %v107, %v219
    %v221 = vpop.f32.mrb[0].mxu0
    %v222 = vadd.f32 %v111, %v221
    %223 = vmatprep.mubr.f32.mxu0 0.0
    %224 = vmatmul.mubr.f32.gmra.mrb[0].mxu0 %v128
    %v225 = vpop.f32.mrb[0].mxu0
    %v226 = vadd.f32 %v107, %v225
    %v227 = vpop.f32.mrb[0].mxu0
    %v228 = vadd.f32 %v111, %v227
    %229 = vmatprep.mubr.f32.mxu0 0.0
    %230 = vmatmul.mubr.f32.gmra.mrb[0].mxu0 %v131
    %v231 = vpop.f32.mrb[0].mxu0
    %v232 = vadd.f32 %v107, %v231
    %v233 = vpop.f32.mrb[0].mxu0
    %v234 = vadd.f32 %v111, %v233
    %235 = vmatprep.mubr.f32.mxu0 0.0
    %236 = vmatmul.mubr.f32.gmra.mrb[0].mxu0 %v134
    %v237 = vpop.f32.mrb[0].mxu0
    %v238 = vadd.f32 %v107, %v237
    %v239 = vpop.f32.mrb[0].mxu0
    %v240 = vadd.f32 %v111, %v239
    %241 = vdwg.mxu0
    %v242 = vadd.f32 %v71, %v72
    %v243 = vadd.f32 %v242, %v73
    %v244 = vadd.f32 %v243, %v74
    %v245 = vmul.f32 %v244, 0.25
    %v247 = vsel %vm114, %v245, 0
    %249 = vmatprep.subr.mxu0 0.0
    %250 = vmatpush1.msra.mxu0 %v83
    %251 = vmatprep.subr.mxu0 0.0
    %252 = vmatpush1.msra.mxu0 %v84
    %253 = vmatprep.subr.mxu0 0.0
    %254 = vmatpush1.msra.mxu0 %v85
    %255 = vmatprep.subr.mxu0 0.0
    %256 = vmatpush1.msra.mxu0 %v86
    %257 = vmatprep.subr.mxu0 0.0
    %258 = vmatpush1.msra.mxu0 0.0
    %259 = vmatprep.subr.mxu0 0.0
    %260 = vmatpush1.msra.mxu0 0.0
    %261 = vmatprep.subr.mxu0 0.0
    %262 = vmatpush1.msra.mxu0 0.0
    %263 = vmatprep.subr.mxu0 0.0
    %264 = vmatpush1.msra.mxu0 0.0
    %265 = vmatprep.subr.mxu0 0.0
    %266 = vmatpush1.msra.mxu0 0.0
    %267 = vmatprep.subr.mxu0 0.0
    %268 = vmatpush1.msra.mxu0 0.0
    %269 = vmatprep.subr.mxu0 0.0
    %270 = vmatpush1.msra.mxu0 0.0
    %271 = vmatprep.subr.mxu0 0.0
    %272 = vmatpush1.msra.mxu0 0.0
    %273 = vmatprep.subr.mxu0 0.0
    %274 = vmatpush1.msra.mxu0 0.0
    %275 = vmatprep.subr.mxu0 0.0
    %276 = vmatpush1.msra.mxu0 0.0
    %277 = vmatprep.subr.mxu0 0.0
    %278 = vmatpush1.msra.mxu0 0.0
    %279 = vmatprep.subr.mxu0 0.0
    %280 = vmatpush1.msra.mxu0 0.0
    %281 = vmatprep.subr.mxu0 0.0
    %282 = vmatpush1.msra.mxu0 0.0
    %283 = vmatprep.subr.mxu0 0.0
    %284 = vmatpush1.msra.mxu0 0.0
    %285 = vmatprep.subr.mxu0 0.0
    %286 = vmatpush1.msra.mxu0 0.0
    %287 = vmatprep.subr.mxu0 0.0
    %288 = vmatpush1.msra.mxu0 0.0
    %289 = vmatprep.subr.mxu0 0.0
    %290 = vmatpush1.msra.mxu0 0.0
    %291 = vmatprep.subr.mxu0 0.0
    %292 = vmatpush1.msra.mxu0 0.0
    %293 = vmatprep.subr.mxu0 0.0
    %294 = vmatpush1.msra.mxu0 0.0
    %295 = vmatprep.subr.mxu0 0.0
    %296 = vmatpush1.msra.mxu0 0.0
    %297 = vmatprep.subr.mxu0 0.0
    %298 = vmatpush1.msra.mxu0 0.0
    %299 = vmatprep.subr.mxu0 0.0
    %300 = vmatpush1.msra.mxu0 0.0
    %301 = vmatprep.subr.mxu0 0.0
    %302 = vmatpush1.msra.mxu0 0.0
    %303 = vmatprep.subr.mxu0 0.0
    %304 = vmatpush1.msra.mxu0 0.0
    %305 = vmatprep.subr.mxu0 0.0
    %306 = vmatpush1.msra.mxu0 0.0
    %307 = vmatprep.subr.mxu0 0.0
    %308 = vmatpush1.msra.mxu0 0.0
    %309 = vmatprep.subr.mxu0 0.0
    %310 = vmatpush1.msra.mxu0 0.0
    %311 = vmatprep.subr.mxu0 0.0
    %312 = vmatpush1.msra.mxu0 0.0
    %313 = vmatprep.mubr.f32.mxu0 0.0
    %314 = vmatmul.mubr.f32.gmra.mrb[0].mxu0 %v247
    %v315 = vpop.f32.mrb[0].mxu0
    %v316 = vadd.f32 0.0, %v315
    %v317 = vpop.f32.mrb[0].mxu0
    %318 = vdwg.mxu0
    %v319 = vadd.f32 %v203, %v316
    %v320 = vxor.u32 %v319, 2147483648
    %v321 = vmul.f32 %v320, 1.442695
    %v322 = vpow.pop %v321
    %v323 = vadd.f32 %v322, 1.0
    %v324 = vrcp.pop %v323
    %v325 = vmul.f32 1.0, %v324
    %v326 = vmul.f32 %v325, 2.0
    %v327 = vsub.f32 %v326, 1.0
    %v328 = vmul.f32 %v325, 0.0
    %330 = vrot.lane.b32.xlu0 %v327, 64
    %v331 = vpop.permute.xlu0 %330
    %v333 = vmul.f32 %v325, %v331
    %335 = vrot.lane.b32.xlu0 %v333, 32
    %v336 = vpop.permute.xlu0 %335
    %v338 = vadd.f32 %v328, %v336
    %v339 = vtanh.pop %v338
    %341 = vrot.lane.b32.xlu0 %v339, 64
    %v342 = vpop.permute.xlu0 %341
    %v344 = vmul.f32 %v325, %v342
    %346 = vrot.lane.b32.xlu0 %v344, 32
    %v347 = vpop.permute.xlu0 %346
    %v348 = vsel %vm114, %v347, 0
    %350 = vmatprep.subr.mxu0 %v76
    %351 = vmatpush1.msra.mxu0 %v75
    %352 = vmatprep.subr.mxu0 %v78
    %353 = vmatpush1.msra.mxu0 %v77
    %354 = vmatprep.subr.mxu0 %v80
    %355 = vmatpush1.msra.mxu0 %v79
    %356 = vmatprep.subr.mxu0 %v82
    %357 = vmatpush1.msra.mxu0 %v81
    %358 = vmatprep.subr.mxu0 0.0
    %359 = vmatpush1.msra.mxu0 0.0
    %360 = vmatprep.subr.mxu0 0.0
    %361 = vmatpush1.msra.mxu0 0.0
    %362 = vmatprep.subr.mxu0 0.0
    %363 = vmatpush1.msra.mxu0 0.0
    %364 = vmatprep.subr.mxu0 0.0
    %365 = vmatpush1.msra.mxu0 0.0
    %366 = vmatprep.subr.mxu0 0.0
    %367 = vmatpush1.msra.mxu0 0.0
    %368 = vmatprep.subr.mxu0 0.0
    %369 = vmatpush1.msra.mxu0 0.0
    %370 = vmatprep.subr.mxu0 0.0
    %371 = vmatpush1.msra.mxu0 0.0
    %372 = vmatprep.subr.mxu0 0.0
    %373 = vmatpush1.msra.mxu0 0.0
    %374 = vmatprep.subr.mxu0 0.0
    %375 = vmatpush1.msra.mxu0 0.0
    %376 = vmatprep.subr.mxu0 0.0
    %377 = vmatpush1.msra.mxu0 0.0
    %378 = vmatprep.subr.mxu0 0.0
    %379 = vmatpush1.msra.mxu0 0.0
    %380 = vmatprep.subr.mxu0 0.0
    %381 = vmatpush1.msra.mxu0 0.0
    %382 = vmatprep.subr.mxu0 0.0
    %383 = vmatpush1.msra.mxu0 0.0
    %384 = vmatprep.subr.mxu0 0.0
    %385 = vmatpush1.msra.mxu0 0.0
    %386 = vmatprep.subr.mxu0 0.0
    %387 = vmatpush1.msra.mxu0 0.0
    %388 = vmatprep.subr.mxu0 0.0
    %389 = vmatpush1.msra.mxu0 0.0
    %390 = vmatprep.subr.mxu0 0.0
    %391 = vmatpush1.msra.mxu0 0.0
    %392 = vmatprep.subr.mxu0 0.0
    %393 = vmatpush1.msra.mxu0 0.0
    %394 = vmatprep.subr.mxu0 0.0
    %395 = vmatpush1.msra.mxu0 0.0
    %396 = vmatprep.subr.mxu0 0.0
    %397 = vmatpush1.msra.mxu0 0.0
    %398 = vmatprep.subr.mxu0 0.0
    %399 = vmatpush1.msra.mxu0 0.0
    %400 = vmatprep.subr.mxu0 0.0
    %401 = vmatpush1.msra.mxu0 0.0
    %402 = vmatprep.subr.mxu0 0.0
    %403 = vmatpush1.msra.mxu0 0.0
    %404 = vmatprep.subr.mxu0 0.0
    %405 = vmatpush1.msra.mxu0 0.0
    %406 = vmatprep.subr.mxu0 0.0
    %407 = vmatpush1.msra.mxu0 0.0
    %408 = vmatprep.subr.mxu0 0.0
    %409 = vmatpush1.msra.mxu0 0.0
    %410 = vmatprep.subr.mxu0 0.0
    %411 = vmatpush1.msra.mxu0 0.0
    %412 = vmatprep.subr.mxu0 0.0
    %413 = vmatpush1.msra.mxu0 0.0
    %414 = vmatprep.mubr.f32.mxu0 0.0
    %415 = vmatmul.mubr.f32.gmra.mrb[0].mxu0 %v348
    %v416 = vpop.f32.mrb[0].mxu0
    %v417 = vadd.f32 0.0, %v416
    %v418 = vpop.f32.mrb[0].mxu0
    %v419 = vadd.f32 0.0, %v418
    %420 = vdwg.mxu0
    %v421 = vadd.f32 %v210, %v419
    %v422 = vmax.f32 %v421, 0.0
    %vm423 = vcmask 31744
    %v424 = vsel %vm423, %v422, -inf
    %425 = vmax.xlane.f32.xlu0 %v424
    %v426 = vpop.xlane.xlu0 %425
    %v427 = vsub.f32 %v422, %v426
    %v428 = vmul.f32 %v427, 1.442695
    %v429 = vpow.pop %v428
    %v430 = vsel %vm423, %v429, 0.0
    %431 = vadd.xlane.f32.xlu0 %v430
    %v432 = vpop.xlane.xlu0 %431
    %v433 = vrcp.pop %v432
    %v434 = vmul.f32 %v429, %v433
    %436 = vset.pattern.permute.xlu0 0
    %437 = vperm.xlu0 %436, %v434
    %v438 = vpop.permute.xlu0 %437
    %v440 = vmul.f32 %v438, %v71
    %441 = vset.pattern.permute.xlu0 1
    %442 = vperm.xlu0 %441, %v434
    %v443 = vpop.permute.xlu0 %442
    %v445 = vmul.f32 %v443, %v72
    %v446 = vadd.f32 %v440, %v445
    %447 = vset.pattern.permute.xlu0 2
    %448 = vperm.xlu0 %447, %v434
    %v449 = vpop.permute.xlu0 %448
    %v451 = vmul.f32 %v449, %v73
    %v452 = vadd.f32 %v446, %v451
    %453 = vset.pattern.permute.xlu0 3
    %454 = vperm.xlu0 %453, %v434
    %v455 = vpop.permute.xlu0 %454
    %v457 = vmul.f32 %v455, %v74
    %v458 = vadd.f32 %v452, %v457
    %v459 = vadd.f32 %v208, %v417
    %v461 = vsel %vm114, %v458, 0
    %463 = vmatprep.subr.mxu0 0.0
    %464 = vmatpush1.msra.mxu0 %v83
    %465 = vmatprep.subr.mxu0 0.0
    %466 = vmatpush1.msra.mxu0 %v84
    %467 = vmatprep.subr.mxu0 0.0
    %468 = vmatpush1.msra.mxu0 %v85
    %469 = vmatprep.subr.mxu0 0.0
    %470 = vmatpush1.msra.mxu0 %v86
    %471 = vmatprep.subr.mxu0 0.0
    %472 = vmatpush1.msra.mxu0 0.0
    %473 = vmatprep.subr.mxu0 0.0
    %474 = vmatpush1.msra.mxu0 0.0
    %475 = vmatprep.subr.mxu0 0.0
    %476 = vmatpush1.msra.mxu0 0.0
    %477 = vmatprep.subr.mxu0 0.0
    %478 = vmatpush1.msra.mxu0 0.0
    %479 = vmatprep.subr.mxu0 0.0
    %480 = vmatpush1.msra.mxu0 0.0
    %481 = vmatprep.subr.mxu0 0.0
    %482 = vmatpush1.msra.mxu0 0.0
    %483 = vmatprep.subr.mxu0 0.0
    %484 = vmatpush1.msra.mxu0 0.0
    %485 = vmatprep.subr.mxu0 0.0
    %486 = vmatpush1.msra.mxu0 0.0
    %487 = vmatprep.subr.mxu0 0.0
    %488 = vmatpush1.msra.mxu0 0.0
    %489 = vmatprep.subr.mxu0 0.0
    %490 = vmatpush1.msra.mxu0 0.0
    %491 = vmatprep.subr.mxu0 0.0
    %492 = vmatpush1.msra.mxu0 0.0
    %493 = vmatprep.subr.mxu0 0.0
    %494 = vmatpush1.msra.mxu0 0.0
    %495 = vmatprep.subr.mxu0 0.0
    %496 = vmatpush1.msra.mxu0 0.0
    %497 = vmatprep.subr.mxu0 0.0
    %498 = vmatpush1.msra.mxu0 0.0
    %499 = vmatprep.subr.mxu0 0.0
    %500 = vmatpush1.msra.mxu0 0.0
    %501 = vmatprep.subr.mxu0 0.0
    %502 = vmatpush1.msra.mxu0 0.0
    %503 = vmatprep.subr.mxu0 0.0
    %504 = vmatpush1.msra.mxu0 0.0
    %505 = vmatprep.subr.mxu0 0.0
    %506 = vmatpush1.msra.mxu0 0.0
    %507 = vmatprep.subr.mxu0 0.0
    %508 = vmatpush1.msra.mxu0 0.0
    %509 = vmatprep.subr.mxu0 0.0
    %510 = vmatpush1.msra.mxu0 0.0
    %511 = vmatprep.subr.mxu0 0.0
    %512 = vmatpush1.msra.mxu0 0.0
    %513 = vmatprep.subr.mxu0 0.0
    %514 = vmatpush1.msra.mxu0 0.0
    %515 = vmatprep.subr.mxu0 0.0
    %516 = vmatpush1.msra.mxu0 0.0
    %517 = vmatprep.subr.mxu0 0.0
    %518 = vmatpush1.msra.mxu0 0.0
    %519 = vmatprep.subr.mxu0 0.0
    %520 = vmatpush1.msra.mxu0 0.0
    %521 = vmatprep.subr.mxu0 0.0
    %522 = vmatpush1.msra.mxu0 0.0
    %523 = vmatprep.subr.mxu0 0.0
    %524 = vmatpush1.msra.mxu0 0.0
    %525 = vmatprep.subr.mxu0 0.0
    %526 = vmatpush1.msra.mxu0 0.0
    %527 = vmatprep.mubr.f32.mxu0 0.0
    %528 = vmatmul.mubr.f32.gmra.mrb[0].mxu0 %v461
    %v529 = vpop.f32.mrb[0].mxu0
    %v530 = vadd.f32 0.0, %v529
    %v531 = vpop.f32.mrb[0].mxu0
    %532 = vdwg.mxu0
    %v533 = vadd.f32 %v459, %v530
    %v534 = vxor.u32 %v533, 2147483648
    %v535 = vmul.f32 %v534, 1.442695
    %v536 = vpow.pop %v535
    %v537 = vadd.f32 %v536, 1.0
    %v538 = vrcp.pop %v537
    %v539 = vmul.f32 1.0, %v538
    %v540 = vmul.f32 %v539, 2.0
    %v541 = vsub.f32 %v540, 1.0
    %v542 = vmul.f32 %v539, %v338
    %544 = vrot.lane.b32.xlu0 %v541, 64
    %v545 = vpop.permute.xlu0 %544
    %v547 = vmul.f32 %v539, %v545
    %549 = vrot.lane.b32.xlu0 %v547, 32
    %v550 = vpop.permute.xlu0 %549
    %v552 = vadd.f32 %v542, %v550
    %v553 = vtanh.pop %v552
    %555 = vrot.lane.b32.xlu0 %v553, 64
    %v556 = vpop.permute.xlu0 %555
    %v558 = vmul.f32 %v539, %v556
    %560 = vrot.lane.b32.xlu0 %v558, 32
    %v561 = vpop.permute.xlu0 %560
    %v562 = vsel %vm114, %v561, 0
    %564 = vmatprep.subr.mxu0 %v76
    %565 = vmatpush1.msra.mxu0 %v75
    %566 = vmatprep.subr.mxu0 %v78
    %567 = vmatpush1.msra.mxu0 %v77
    %568 = vmatprep.subr.mxu0 %v80
    %569 = vmatpush1.msra.mxu0 %v79
    %570 = vmatprep.subr.mxu0 %v82
    %571 = vmatpush1.msra.mxu0 %v81
    %572 = vmatprep.subr.mxu0 0.0
    %573 = vmatpush1.msra.mxu0 0.0
    %574 = vmatprep.subr.mxu0 0.0
    %575 = vmatpush1.msra.mxu0 0.0
    %576 = vmatprep.subr.mxu0 0.0
    %577 = vmatpush1.msra.mxu0 0.0
    %578 = vmatprep.subr.mxu0 0.0
    %579 = vmatpush1.msra.mxu0 0.0
    %580 = vmatprep.subr.mxu0 0.0
    %581 = vmatpush1.msra.mxu0 0.0
    %582 = vmatprep.subr.mxu0 0.0
    %583 = vmatpush1.msra.mxu0 0.0
    %584 = vmatprep.subr.mxu0 0.0
    %585 = vmatpush1.msra.mxu0 0.0
    %586 = vmatprep.subr.mxu0 0.0
    %587 = vmatpush1.msra.mxu0 0.0
    %588 = vmatprep.subr.mxu0 0.0
    %589 = vmatpush1.msra.mxu0 0.0
    %590 = vmatprep.subr.mxu0 0.0
    %591 = vmatpush1.msra.mxu0 0.0
    %592 = vmatprep.subr.mxu0 0.0
    %593 = vmatpush1.msra.mxu0 0.0
    %594 = vmatprep.subr.mxu0 0.0
    %595 = vmatpush1.msra.mxu0 0.0
    %596 = vmatprep.subr.mxu0 0.0
    %597 = vmatpush1.msra.mxu0 0.0
    %598 = vmatprep.subr.mxu0 0.0
    %599 = vmatpush1.msra.mxu0 0.0
    %600 = vmatprep.subr.mxu0 0.0
    %601 = vmatpush1.msra.mxu0 0.0
    %602 = vmatprep.subr.mxu0 0.0
    %603 = vmatpush1.msra.mxu0 0.0
    %604 = vmatprep.subr.mxu0 0.0
    %605 = vmatpush1.msra.mxu0 0.0
    %606 = vmatprep.subr.mxu0 0.0
    %607 = vmatpush1.msra.mxu0 0.0
    %608 = vmatprep.subr.mxu0 0.0
    %609 = vmatpush1.msra.mxu0 0.0
    %610 = vmatprep.subr.mxu0 0.0
    %611 = vmatpush1.msra.mxu0 0.0
    %612 = vmatprep.subr.mxu0 0.0
    %613 = vmatpush1.msra.mxu0 0.0
    %614 = vmatprep.subr.mxu0 0.0
    %615 = vmatpush1.msra.mxu0 0.0
    %616 = vmatprep.subr.mxu0 0.0
    %617 = vmatpush1.msra.mxu0 0.0
    %618 = vmatprep.subr.mxu0 0.0
    %619 = vmatpush1.msra.mxu0 0.0
    %620 = vmatprep.subr.mxu0 0.0
    %621 = vmatpush1.msra.mxu0 0.0
    %622 = vmatprep.subr.mxu0 0.0
    %623 = vmatpush1.msra.mxu0 0.0
    %624 = vmatprep.subr.mxu0 0.0
    %625 = vmatpush1.msra.mxu0 0.0
    %626 = vmatprep.subr.mxu0 0.0
    %627 = vmatpush1.msra.mxu0 0.0
    %628 = vmatprep.mubr.f32.mxu0 0.0
    %629 = vmatmul.mubr.f32.gmra.mrb[0].mxu0 %v562
    %v630 = vpop.f32.mrb[0].mxu0
    %v631 = vadd.f32 0.0, %v630
    %v632 = vpop.f32.mrb[0].mxu0
    %v633 = vadd.f32 0.0, %v632
    %634 = vdwg.mxu0
    %v635 = vadd.f32 %v216, %v633
    %v636 = vmax.f32 %v635, 0.0
    %v637 = vsel %vm423, %v636, -inf
    %638 = vmax.xlane.f32.xlu0 %v637
    %v639 = vpop.xlane.xlu0 %638
    %v640 = vsub.f32 %v636, %v639
    %v641 = vmul.f32 %v640, 1.442695
    %v642 = vpow.pop %v641
    %v643 = vsel %vm423, %v642, 0.0
    %644 = vadd.xlane.f32.xlu0 %v643
    %v645 = vpop.xlane.xlu0 %644
    %v646 = vrcp.pop %v645
    %v647 = vmul.f32 %v642, %v646
    %649 = vset.pattern.permute.xlu0 0
    %650 = vperm.xlu0 %649, %v647
    %v651 = vpop.permute.xlu0 %650
    %v653 = vmul.f32 %v651, %v71
    %654 = vset.pattern.permute.xlu0 1
    %655 = vperm.xlu0 %654, %v647
    %v656 = vpop.permute.xlu0 %655
    %v658 = vmul.f32 %v656, %v72
    %v659 = vadd.f32 %v653, %v658
    %660 = vset.pattern.permute.xlu0 2
    %661 = vperm.xlu0 %660, %v647
    %v662 = vpop.permute.xlu0 %661
    %v664 = vmul.f32 %v662, %v73
    %v665 = vadd.f32 %v659, %v664
    %666 = vset.pattern.permute.xlu0 3
    %667 = vperm.xlu0 %666, %v647
    %v668 = vpop.permute.xlu0 %667
    %v670 = vmul.f32 %v668, %v74
    %v671 = vadd.f32 %v665, %v670
    %v672 = vadd.f32 %v214, %v631
    %v674 = vsel %vm114, %v671, 0
    %676 = vmatprep.subr.mxu0 0.0
    %677 = vmatpush1.msra.mxu0 %v83
    %678 = vmatprep.subr.mxu0 0.0
    %679 = vmatpush1.msra.mxu0 %v84
    %680 = vmatprep.subr.mxu0 0.0
    %681 = vmatpush1.msra.mxu0 %v85
    %682 = vmatprep.subr.mxu0 0.0
    %683 = vmatpush1.msra.mxu0 %v86
    %684 = vmatprep.subr.mxu0 0.0
    %685 = vmatpush1.msra.mxu0 0.0
    %686 = vmatprep.subr.mxu0 0.0
    %687 = vmatpush1.msra.mxu0 0.0
    %688 = vmatprep.subr.mxu0 0.0
    %689 = vmatpush1.msra.mxu0 0.0
    %690 = vmatprep.subr.mxu0 0.0
    %691 = vmatpush1.msra.mxu0 0.0
    %692 = vmatprep.subr.mxu0 0.0
    %693 = vmatpush1.msra.mxu0 0.0
    %694 = vmatprep.subr.mxu0 0.0
    %695 = vmatpush1.msra.mxu0 0.0
    %696 = vmatprep.subr.mxu0 0.0
    %697 = vmatpush1.msra.mxu0 0.0
    %698 = vmatprep.subr.mxu0 0.0
    %699 = vmatpush1.msra.mxu0 0.0
    %700 = vmatprep.subr.mxu0 0.0
    %701 = vmatpush1.msra.mxu0 0.0
    %702 = vmatprep.subr.mxu0 0.0
    %703 = vmatpush1.msra.mxu0 0.0
    %704 = vmatprep.subr.mxu0 0.0
    %705 = vmatpush1.msra.mxu0 0.0
    %706 = vmatprep.subr.mxu0 0.0
    %707 = vmatpush1.msra.mxu0 0.0
    %708 = vmatprep.subr.mxu0 0.0
    %709 = vmatpush1.msra.mxu0 0.0
    %710 = vmatprep.subr.mxu0 0.0
    %711 = vmatpush1.msra.mxu0 0.0
    %712 = vmatprep.subr.mxu0 0.0
    %713 = vmatpush1.msra.mxu0 0.0
    %714 = vmatprep.subr.mxu0 0.0
    %715 = vmatpush1.msra.mxu0 0.0
    %716 = vmatprep.subr.mxu0 0.0
    %717 = vmatpush1.msra.mxu0 0.0
    %718 = vmatprep.subr.mxu0 0.0
    %719 = vmatpush1.msra.mxu0 0.0
    %720 = vmatprep.subr.mxu0 0.0
    %721 = vmatpush1.msra.mxu0 0.0
    %722 = vmatprep.subr.mxu0 0.0
    %723 = vmatpush1.msra.mxu0 0.0
    %724 = vmatprep.subr.mxu0 0.0
    %725 = vmatpush1.msra.mxu0 0.0
    %726 = vmatprep.subr.mxu0 0.0
    %727 = vmatpush1.msra.mxu0 0.0
    %728 = vmatprep.subr.mxu0 0.0
    %729 = vmatpush1.msra.mxu0 0.0
    %730 = vmatprep.subr.mxu0 0.0
    %731 = vmatpush1.msra.mxu0 0.0
    %732 = vmatprep.subr.mxu0 0.0
    %733 = vmatpush1.msra.mxu0 0.0
    %734 = vmatprep.subr.mxu0 0.0
    %735 = vmatpush1.msra.mxu0 0.0
    %736 = vmatprep.subr.mxu0 0.0
    %737 = vmatpush1.msra.mxu0 0.0
    %738 = vmatprep.subr.mxu0 0.0
    %739 = vmatpush1.msra.mxu0 0.0
    %740 = vmatprep.mubr.f32.mxu0 0.0
    %741 = vmatmul.mubr.f32.gmra.mrb[0].mxu0 %v674
    %v742 = vpop.f32.mrb[0].mxu0
    %v743 = vadd.f32 0.0, %v742
    %v744 = vpop.f32.mrb[0].mxu0
    %745 = vdwg.mxu0
    %v746 = vadd.f32 %v672, %v743
    %v747 = vxor.u32 %v746, 2147483648
    %v748 = vmul.f32 %v747, 1.442695
    %v749 = vpow.pop %v748
    %v750 = vadd.f32 %v749, 1.0
    %v751 = vrcp.pop %v750
    %v752 = vmul.f32 1.0, %v751
    %v753 = vmul.f32 %v752, 2.0
    %v754 = vsub.f32 %v753, 1.0
    %v755 = vmul.f32 %v752, %v552
    %757 = vrot.lane.b32.xlu0 %v754, 64
    %v758 = vpop.permute.xlu0 %757
    %v760 = vmul.f32 %v752, %v758
    %762 = vrot.lane.b32.xlu0 %v760, 32
    %v763 = vpop.permute.xlu0 %762
    %v765 = vadd.f32 %v755, %v763
    %v766 = vtanh.pop %v765
    %768 = vrot.lane.b32.xlu0 %v766, 64
    %v769 = vpop.permute.xlu0 %768
    %v771 = vmul.f32 %v752, %v769
    %773 = vrot.lane.b32.xlu0 %v771, 32
    %v774 = vpop.permute.xlu0 %773
    %v775 = vsel %vm114, %v774, 0
    %777 = vmatprep.subr.mxu0 %v76
    %778 = vmatpush1.msra.mxu0 %v75
    %779 = vmatprep.subr.mxu0 %v78
    %780 = vmatpush1.msra.mxu0 %v77
    %781 = vmatprep.subr.mxu0 %v80
    %782 = vmatpush1.msra.mxu0 %v79
    %783 = vmatprep.subr.mxu0 %v82
    %784 = vmatpush1.msra.mxu0 %v81
    %785 = vmatprep.subr.mxu0 0.0
    %786 = vmatpush1.msra.mxu0 0.0
    %787 = vmatprep.subr.mxu0 0.0
    %788 = vmatpush1.msra.mxu0 0.0
    %789 = vmatprep.subr.mxu0 0.0
    %790 = vmatpush1.msra.mxu0 0.0
    %791 = vmatprep.subr.mxu0 0.0
    %792 = vmatpush1.msra.mxu0 0.0
    %793 = vmatprep.subr.mxu0 0.0
    %794 = vmatpush1.msra.mxu0 0.0
    %795 = vmatprep.subr.mxu0 0.0
    %796 = vmatpush1.msra.mxu0 0.0
    %797 = vmatprep.subr.mxu0 0.0
    %798 = vmatpush1.msra.mxu0 0.0
    %799 = vmatprep.subr.mxu0 0.0
    %800 = vmatpush1.msra.mxu0 0.0
    %801 = vmatprep.subr.mxu0 0.0
    %802 = vmatpush1.msra.mxu0 0.0
    %803 = vmatprep.subr.mxu0 0.0
    %804 = vmatpush1.msra.mxu0 0.0
    %805 = vmatprep.subr.mxu0 0.0
    %806 = vmatpush1.msra.mxu0 0.0
    %807 = vmatprep.subr.mxu0 0.0
    %808 = vmatpush1.msra.mxu0 0.0
    %809 = vmatprep.subr.mxu0 0.0
    %810 = vmatpush1.msra.mxu0 0.0
    %811 = vmatprep.subr.mxu0 0.0
    %812 = vmatpush1.msra.mxu0 0.0
    %813 = vmatprep.subr.mxu0 0.0
    %814 = vmatpush1.msra.mxu0 0.0
    %815 = vmatprep.subr.mxu0 0.0
    %816 = vmatpush1.msra.mxu0 0.0
    %817 = vmatprep.subr.mxu0 0.0
    %818 = vmatpush1.msra.mxu0 0.0
    %819 = vmatprep.subr.mxu0 0.0
    %820 = vmatpush1.msra.mxu0 0.0
    %821 = vmatprep.subr.mxu0 0.0
    %822 = vmatpush1.msra.mxu0 0.0
    %823 = vmatprep.subr.mxu0 0.0
    %824 = vmatpush1.msra.mxu0 0.0
    %825 = vmatprep.subr.mxu0 0.0
    %826 = vmatpush1.msra.mxu0 0.0
    %827 = vmatprep.subr.mxu0 0.0
    %828 = vmatpush1.msra.mxu0 0.0
    %829 = vmatprep.subr.mxu0 0.0
    %830 = vmatpush1.msra.mxu0 0.0
    %831 = vmatprep.subr.mxu0 0.0
    %832 = vmatpush1.msra.mxu0 0.0
    %833 = vmatprep.subr.mxu0 0.0
    %834 = vmatpush1.msra.mxu0 0.0
    %835 = vmatprep.subr.mxu0 0.0
    %836 = vmatpush1.msra.mxu0 0.0
    %837 = vmatprep.subr.mxu0 0.0
    %838 = vmatpush1.msra.mxu0 0.0
    %839 = vmatprep.subr.mxu0 0.0
    %840 = vmatpush1.msra.mxu0 0.0
    %841 = vmatprep.mubr.f32.mxu0 0.0
    %842 = vmatmul.mubr.f32.gmra.mrb[0].mxu0 %v775
    %v843 = vpop.f32.mrb[0].mxu0
    %v844 = vadd.f32 0.0, %v843
    %v845 = vpop.f32.mrb[0].mxu0
    %v846 = vadd.f32 0.0, %v845
    %847 = vdwg.mxu0
    %v848 = vadd.f32 %v222, %v846
    %v849 = vmax.f32 %v848, 0.0
    %v850 = vsel %vm423, %v849, -inf
    %851 = vmax.xlane.f32.xlu0 %v850
    %v852 = vpop.xlane.xlu0 %851
    %v853 = vsub.f32 %v849, %v852
    %v854 = vmul.f32 %v853, 1.442695
    %v855 = vpow.pop %v854
    %v856 = vsel %vm423, %v855, 0.0
    %857 = vadd.xlane.f32.xlu0 %v856
    %v858 = vpop.xlane.xlu0 %857
    %v859 = vrcp.pop %v858
    %v860 = vmul.f32 %v855, %v859
    %862 = vset.pattern.permute.xlu0 0
    %863 = vperm.xlu0 %862, %v860
    %v864 = vpop.permute.xlu0 %863
    %v866 = vmul.f32 %v864, %v71
    %867 = vset.pattern.permute.xlu0 1
    %868 = vperm.xlu0 %867, %v860
    %v869 = vpop.permute.xlu0 %868
    %v871 = vmul.f32 %v869, %v72
    %v872 = vadd.f32 %v866, %v871
    %873 = vset.pattern.permute.xlu0 2
    %874 = vperm.xlu0 %873, %v860
    %v875 = vpop.permute.xlu0 %874
    %v877 = vmul.f32 %v875, %v73
    %v878 = vadd.f32 %v872, %v877
    %879 = vset.pattern.permute.xlu0 3
    %880 = vperm.xlu0 %879, %v860
    %v881 = vpop.permute.xlu0 %880
    %v883 = vmul.f32 %v881, %v74
    %v884 = vadd.f32 %v878, %v883
    %v885 = vadd.f32 %v220, %v844
    %v887 = vsel %vm114, %v884, 0
    %889 = vmatprep.subr.mxu0 0.0
    %890 = vmatpush1.msra.mxu0 %v83
    %891 = vmatprep.subr.mxu0 0.0
    %892 = vmatpush1.msra.mxu0 %v84
    %893 = vmatprep.subr.mxu0 0.0
    %894 = vmatpush1.msra.mxu0 %v85
    %895 = vmatprep.subr.mxu0 0.0
    %896 = vmatpush1.msra.mxu0 %v86
    %897 = vmatprep.subr.mxu0 0.0
    %898 = vmatpush1.msra.mxu0 0.0
    %899 = vmatprep.subr.mxu0 0.0
    %900 = vmatpush1.msra.mxu0 0.0
    %901 = vmatprep.subr.mxu0 0.0
    %902 = vmatpush1.msra.mxu0 0.0
    %903 = vmatprep.subr.mxu0 0.0
    %904 = vmatpush1.msra.mxu0 0.0
    %905 = vmatprep.subr.mxu0 0.0
    %906 = vmatpush1.msra.mxu0 0.0
    %907 = vmatprep.subr.mxu0 0.0
    %908 = vmatpush1.msra.mxu0 0.0
    %909 = vmatprep.subr.mxu0 0.0
    %910 = vmatpush1.msra.mxu0 0.0
    %911 = vmatprep.subr.mxu0 0.0
    %912 = vmatpush1.msra.mxu0 0.0
    %913 = vmatprep.subr.mxu0 0.0
    %914 = vmatpush1.msra.mxu0 0.0
    %915 = vmatprep.subr.mxu0 0.0
    %916 = vmatpush1.msra.mxu0 0.0
    %917 = vmatprep.subr.mxu0 0.0
    %918 = vmatpush1.msra.mxu0 0.0
    %919 = vmatprep.subr.mxu0 0.0
    %920 = vmatpush1.msra.mxu0 0.0
    %921 = vmatprep.subr.mxu0 0.0
    %922 = vmatpush1.msra.mxu0 0.0
    %923 = vmatprep.subr.mxu0 0.0
    %924 = vmatpush1.msra.mxu0 0.0
    %925 = vmatprep.subr.mxu0 0.0
    %926 = vmatpush1.msra.mxu0 0.0
    %927 = vmatprep.subr.mxu0 0.0
    %928 = vmatpush1.msra.mxu0 0.0
    %929 = vmatprep.subr.mxu0 0.0
    %930 = vmatpush1.msra.mxu0 0.0
    %931 = vmatprep.subr.mxu0 0.0
    %932 = vmatpush1.msra.mxu0 0.0
    %933 = vmatprep.subr.mxu0 0.0
    %934 = vmatpush1.msra.mxu0 0.0
    %935 = vmatprep.subr.mxu0 0.0
    %936 = vmatpush1.msra.mxu0 0.0
    %937 = vmatprep.subr.mxu0 0.0
    %938 = vmatpush1.msra.mxu0 0.0
    %939 = vmatprep.subr.mxu0 0.0
    %940 = vmatpush1.msra.mxu0 0.0
    %941 = vmatprep.subr.mxu0 0.0
    %942 = vmatpush1.msra.mxu0 0.0
    %943 = vmatprep.subr.mxu0 0.0
    %944 = vmatpush1.msra.mxu0 0.0
    %945 = vmatprep.subr.mxu0 0.0
    %946 = vmatpush1.msra.mxu0 0.0
    %947 = vmatprep.subr.mxu0 0.0
    %948 = vmatpush1.msra.mxu0 0.0
    %949 = vmatprep.subr.mxu0 0.0
    %950 = vmatpush1.msra.mxu0 0.0
    %951 = vmatprep.subr.mxu0 0.0
    %952 = vmatpush1.msra.mxu0 0.0
    %953 = vmatprep.mubr.f32.mxu0 0.0
    %954 = vmatmul.mubr.f32.gmra.mrb[0].mxu0 %v887
    %v955 = vpop.f32.mrb[0].mxu0
    %v956 = vadd.f32 0.0, %v955
    %v957 = vpop.f32.mrb[0].mxu0
    %958 = vdwg.mxu0
    %v959 = vadd.f32 %v885, %v956
    %v960 = vxor.u32 %v959, 2147483648
    %v961 = vmul.f32 %v960, 1.442695
    %v962 = vpow.pop %v961
    %v963 = vadd.f32 %v962, 1.0
    %v964 = vrcp.pop %v963
    %v965 = vmul.f32 1.0, %v964
    %v966 = vmul.f32 %v965, 2.0
    %v967 = vsub.f32 %v966, 1.0
    %v968 = vmul.f32 %v965, %v765
    %970 = vrot.lane.b32.xlu0 %v967, 64
    %v971 = vpop.permute.xlu0 %970
    %v973 = vmul.f32 %v965, %v971
    %975 = vrot.lane.b32.xlu0 %v973, 32
    %v976 = vpop.permute.xlu0 %975
    %v978 = vadd.f32 %v968, %v976
    %v979 = vtanh.pop %v978
    %981 = vrot.lane.b32.xlu0 %v979, 64
    %v982 = vpop.permute.xlu0 %981
    %v984 = vmul.f32 %v965, %v982
    %986 = vrot.lane.b32.xlu0 %v984, 32
    %v987 = vpop.permute.xlu0 %986
    %v988 = vsel %vm114, %v987, 0
    %990 = vmatprep.subr.mxu0 %v76
    %991 = vmatpush1.msra.mxu0 %v75
    %992 = vmatprep.subr.mxu0 %v78
    %993 = vmatpush1.msra.mxu0 %v77
    %994 = vmatprep.subr.mxu0 %v80
    %995 = vmatpush1.msra.mxu0 %v79
    %996 = vmatprep.subr.mxu0 %v82
    %997 = vmatpush1.msra.mxu0 %v81
    %998 = vmatprep.subr.mxu0 0.0
    %999 = vmatpush1.msra.mxu0 0.0
    %1000 = vmatprep.subr.mxu0 0.0
    %1001 = vmatpush1.msra.mxu0 0.0
    %1002 = vmatprep.subr.mxu0 0.0
    %1003 = vmatpush1.msra.mxu0 0.0
    %1004 = vmatprep.subr.mxu0 0.0
    %1005 = vmatpush1.msra.mxu0 0.0
    %1006 = vmatprep.subr.mxu0 0.0
    %1007 = vmatpush1.msra.mxu0 0.0
    %1008 = vmatprep.subr.mxu0 0.0
    %1009 = vmatpush1.msra.mxu0 0.0
    %1010 = vmatprep.subr.mxu0 0.0
    %1011 = vmatpush1.msra.mxu0 0.0
    %1012 = vmatprep.subr.mxu0 0.0
    %1013 = vmatpush1.msra.mxu0 0.0
    %1014 = vmatprep.subr.mxu0 0.0
    %1015 = vmatpush1.msra.mxu0 0.0
    %1016 = vmatprep.subr.mxu0 0.0
    %1017 = vmatpush1.msra.mxu0 0.0
    %1018 = vmatprep.subr.mxu0 0.0
    %1019 = vmatpush1.msra.mxu0 0.0
    %1020 = vmatprep.subr.mxu0 0.0
    %1021 = vmatpush1.msra.mxu0 0.0
    %1022 = vmatprep.subr.mxu0 0.0
    %1023 = vmatpush1.msra.mxu0 0.0
    %1024 = vmatprep.subr.mxu0 0.0
    %1025 = vmatpush1.msra.mxu0 0.0
    %1026 = vmatprep.subr.mxu0 0.0
    %1027 = vmatpush1.msra.mxu0 0.0
    %1028 = vmatprep.subr.mxu0 0.0
    %1029 = vmatpush1.msra.mxu0 0.0
    %1030 = vmatprep.subr.mxu0 0.0
    %1031 = vmatpush1.msra.mxu0 0.0
    %1032 = vmatprep.subr.mxu0 0.0
    %1033 = vmatpush1.msra.mxu0 0.0
    %1034 = vmatprep.subr.mxu0 0.0
    %1035 = vmatpush1.msra.mxu0 0.0
    %1036 = vmatprep.subr.mxu0 0.0
    %1037 = vmatpush1.msra.mxu0 0.0
    %1038 = vmatprep.subr.mxu0 0.0
    %1039 = vmatpush1.msra.mxu0 0.0
    %1040 = vmatprep.subr.mxu0 0.0
    %1041 = vmatpush1.msra.mxu0 0.0
    %1042 = vmatprep.subr.mxu0 0.0
    %1043 = vmatpush1.msra.mxu0 0.0
    %1044 = vmatprep.subr.mxu0 0.0
    %1045 = vmatpush1.msra.mxu0 0.0
    %1046 = vmatprep.subr.mxu0 0.0
    %1047 = vmatpush1.msra.mxu0 0.0
    %1048 = vmatprep.subr.mxu0 0.0
    %1049 = vmatpush1.msra.mxu0 0.0
    %1050 = vmatprep.subr.mxu0 0.0
    %1051 = vmatpush1.msra.mxu0 0.0
    %1052 = vmatprep.subr.mxu0 0.0
    %1053 = vmatpush1.msra.mxu0 0.0
    %1054 = vmatprep.mubr.f32.mxu0 0.0
    %1055 = vmatmul.mubr.f32.gmra.mrb[0].mxu0 %v988
    %v1056 = vpop.f32.mrb[0].mxu0
    %v1057 = vadd.f32 0.0, %v1056
    %v1058 = vpop.f32.mrb[0].mxu0
    %v1059 = vadd.f32 0.0, %v1058
    %1060 = vdwg.mxu0
    %v1061 = vadd.f32 %v228, %v1059
    %v1062 = vmax.f32 %v1061, 0.0
    %v1063 = vsel %vm423, %v1062, -inf
    %1064 = vmax.xlane.f32.xlu0 %v1063
    %v1065 = vpop.xlane.xlu0 %1064
    %v1066 = vsub.f32 %v1062, %v1065
    %v1067 = vmul.f32 %v1066, 1.442695
    %v1068 = vpow.pop %v1067
    %v1069 = vsel %vm423, %v1068, 0.0
    %1070 = vadd.xlane.f32.xlu0 %v1069
    %v1071 = vpop.xlane.xlu0 %1070
    %v1072 = vrcp.pop %v1071
    %v1073 = vmul.f32 %v1068, %v1072
    %1075 = vset.pattern.permute.xlu0 0
    %1076 = vperm.xlu0 %1075, %v1073
    %v1077 = vpop.permute.xlu0 %1076
    %v1079 = vmul.f32 %v1077, %v71
    %1080 = vset.pattern.permute.xlu0 1
    %1081 = vperm.xlu0 %1080, %v1073
    %v1082 = vpop.permute.xlu0 %1081
    %v1084 = vmul.f32 %v1082, %v72
    %v1085 = vadd.f32 %v1079, %v1084
    %1086 = vset.pattern.permute.xlu0 2
    %1087 = vperm.xlu0 %1086, %v1073
    %v1088 = vpop.permute.xlu0 %1087
    %v1090 = vmul.f32 %v1088, %v73
    %v1091 = vadd.f32 %v1085, %v1090
    %1092 = vset.pattern.permute.xlu0 3
    %1093 = vperm.xlu0 %1092, %v1073
    %v1094 = vpop.permute.xlu0 %1093
    %v1096 = vmul.f32 %v1094, %v74
    %v1097 = vadd.f32 %v1091, %v1096
    %v1098 = vadd.f32 %v226, %v1057
    %v1100 = vsel %vm114, %v1097, 0
    %1102 = vmatprep.subr.mxu0 0.0
    %1103 = vmatpush1.msra.mxu0 %v83
    %1104 = vmatprep.subr.mxu0 0.0
    %1105 = vmatpush1.msra.mxu0 %v84
    %1106 = vmatprep.subr.mxu0 0.0
    %1107 = vmatpush1.msra.mxu0 %v85
    %1108 = vmatprep.subr.mxu0 0.0
    %1109 = vmatpush1.msra.mxu0 %v86
    %1110 = vmatprep.subr.mxu0 0.0
    %1111 = vmatpush1.msra.mxu0 0.0
    %1112 = vmatprep.subr.mxu0 0.0
    %1113 = vmatpush1.msra.mxu0 0.0
    %1114 = vmatprep.subr.mxu0 0.0
    %1115 = vmatpush1.msra.mxu0 0.0
    %1116 = vmatprep.subr.mxu0 0.0
    %1117 = vmatpush1.msra.mxu0 0.0
    %1118 = vmatprep.subr.mxu0 0.0
    %1119 = vmatpush1.msra.mxu0 0.0
    %1120 = vmatprep.subr.mxu0 0.0
    %1121 = vmatpush1.msra.mxu0 0.0
    %1122 = vmatprep.subr.mxu0 0.0
    %1123 = vmatpush1.msra.mxu0 0.0
    %1124 = vmatprep.subr.mxu0 0.0
    %1125 = vmatpush1.msra.mxu0 0.0
    %1126 = vmatprep.subr.mxu0 0.0
    %1127 = vmatpush1.msra.mxu0 0.0
    %1128 = vmatprep.subr.mxu0 0.0
    %1129 = vmatpush1.msra.mxu0 0.0
    %1130 = vmatprep.subr.mxu0 0.0
    %1131 = vmatpush1.msra.mxu0 0.0
    %1132 = vmatprep.subr.mxu0 0.0
    %1133 = vmatpush1.msra.mxu0 0.0
    %1134 = vmatprep.subr.mxu0 0.0
    %1135 = vmatpush1.msra.mxu0 0.0
    %1136 = vmatprep.subr.mxu0 0.0
    %1137 = vmatpush1.msra.mxu0 0.0
    %1138 = vmatprep.subr.mxu0 0.0
    %1139 = vmatpush1.msra.mxu0 0.0
    %1140 = vmatprep.subr.mxu0 0.0
    %1141 = vmatpush1.msra.mxu0 0.0
    %1142 = vmatprep.subr.mxu0 0.0
    %1143 = vmatpush1.msra.mxu0 0.0
    %1144 = vmatprep.subr.mxu0 0.0
    %1145 = vmatpush1.msra.mxu0 0.0
    %1146 = vmatprep.subr.mxu0 0.0
    %1147 = vmatpush1.msra.mxu0 0.0
    %1148 = vmatprep.subr.mxu0 0.0
    %1149 = vmatpush1.msra.mxu0 0.0
    %1150 = vmatprep.subr.mxu0 0.0
    %1151 = vmatpush1.msra.mxu0 0.0
    %1152 = vmatprep.subr.mxu0 0.0
    %1153 = vmatpush1.msra.mxu0 0.0
    %1154 = vmatprep.subr.mxu0 0.0
    %1155 = vmatpush1.msra.mxu0 0.0
    %1156 = vmatprep.subr.mxu0 0.0
    %1157 = vmatpush1.msra.mxu0 0.0
    %1158 = vmatprep.subr.mxu0 0.0
    %1159 = vmatpush1.msra.mxu0 0.0
    %1160 = vmatprep.subr.mxu0 0.0
    %1161 = vmatpush1.msra.mxu0 0.0
    %1162 = vmatprep.subr.mxu0 0.0
    %1163 = vmatpush1.msra.mxu0 0.0
    %1164 = vmatprep.subr.mxu0 0.0
    %1165 = vmatpush1.msra.mxu0 0.0
    %1166 = vmatprep.mubr.f32.mxu0 0.0
    %1167 = vmatmul.mubr.f32.gmra.mrb[0].mxu0 %v1100
    %v1168 = vpop.f32.mrb[0].mxu0
    %v1169 = vadd.f32 0.0, %v1168
    %v1170 = vpop.f32.mrb[0].mxu0
    %1171 = vdwg.mxu0
    %v1172 = vadd.f32 %v1098, %v1169
    %v1173 = vxor.u32 %v1172, 2147483648
    %v1174 = vmul.f32 %v1173, 1.442695
    %v1175 = vpow.pop %v1174
    %v1176 = vadd.f32 %v1175, 1.0
    %v1177 = vrcp.pop %v1176
    %v1178 = vmul.f32 1.0, %v1177
    %v1179 = vmul.f32 %v1178, 2.0
    %v1180 = vsub.f32 %v1179, 1.0
    %v1181 = vmul.f32 %v1178, %v978
    %1183 = vrot.lane.b32.xlu0 %v1180, 64
    %v1184 = vpop.permute.xlu0 %1183
    %v1186 = vmul.f32 %v1178, %v1184
    %1188 = vrot.lane.b32.xlu0 %v1186, 32
    %v1189 = vpop.permute.xlu0 %1188
    %v1191 = vadd.f32 %v1181, %v1189
    %v1192 = vtanh.pop %v1191
    %1194 = vrot.lane.b32.xlu0 %v1192, 64
    %v1195 = vpop.permute.xlu0 %1194
    %v1197 = vmul.f32 %v1178, %v1195
    %1199 = vrot.lane.b32.xlu0 %v1197, 32
    %v1200 = vpop.permute.xlu0 %1199
    %v1201 = vsel %vm114, %v1200, 0
    %1203 = vmatprep.subr.mxu0 %v76
    %1204 = vmatpush1.msra.mxu0 %v75
    %1205 = vmatprep.subr.mxu0 %v78
    %1206 = vmatpush1.msra.mxu0 %v77
    %1207 = vmatprep.subr.mxu0 %v80
    %1208 = vmatpush1.msra.mxu0 %v79
    %1209 = vmatprep.subr.mxu0 %v82
    %1210 = vmatpush1.msra.mxu0 %v81
    %1211 = vmatprep.subr.mxu0 0.0
    %1212 = vmatpush1.msra.mxu0 0.0
    %1213 = vmatprep.subr.mxu0 0.0
    %1214 = vmatpush1.msra.mxu0 0.0
    %1215 = vmatprep.subr.mxu0 0.0
    %1216 = vmatpush1.msra.mxu0 0.0
    %1217 = vmatprep.subr.mxu0 0.0
    %1218 = vmatpush1.msra.mxu0 0.0
    %1219 = vmatprep.subr.mxu0 0.0
    %1220 = vmatpush1.msra.mxu0 0.0
    %1221 = vmatprep.subr.mxu0 0.0
    %1222 = vmatpush1.msra.mxu0 0.0
    %1223 = vmatprep.subr.mxu0 0.0
    %1224 = vmatpush1.msra.mxu0 0.0
    %1225 = vmatprep.subr.mxu0 0.0
    %1226 = vmatpush1.msra.mxu0 0.0
    %1227 = vmatprep.subr.mxu0 0.0
    %1228 = vmatpush1.msra.mxu0 0.0
    %1229 = vmatprep.subr.mxu0 0.0
    %1230 = vmatpush1.msra.mxu0 0.0
    %1231 = vmatprep.subr.mxu0 0.0
    %1232 = vmatpush1.msra.mxu0 0.0
    %1233 = vmatprep.subr.mxu0 0.0
    %1234 = vmatpush1.msra.mxu0 0.0
    %1235 = vmatprep.subr.mxu0 0.0
    %1236 = vmatpush1.msra.mxu0 0.0
    %1237 = vmatprep.subr.mxu0 0.0
    %1238 = vmatpush1.msra.mxu0 0.0
    %1239 = vmatprep.subr.mxu0 0.0
    %1240 = vmatpush1.msra.mxu0 0.0
    %1241 = vmatprep.subr.mxu0 0.0
    %1242 = vmatpush1.msra.mxu0 0.0
    %1243 = vmatprep.subr.mxu0 0.0
    %1244 = vmatpush1.msra.mxu0 0.0
    %1245 = vmatprep.subr.mxu0 0.0
    %1246 = vmatpush1.msra.mxu0 0.0
    %1247 = vmatprep.subr.mxu0 0.0
    %1248 = vmatpush1.msra.mxu0 0.0
    %1249 = vmatprep.subr.mxu0 0.0
    %1250 = vmatpush1.msra.mxu0 0.0
    %1251 = vmatprep.subr.mxu0 0.0
    %1252 = vmatpush1.msra.mxu0 0.0
    %1253 = vmatprep.subr.mxu0 0.0
    %1254 = vmatpush1.msra.mxu0 0.0
    %1255 = vmatprep.subr.mxu0 0.0
    %1256 = vmatpush1.msra.mxu0 0.0
    %1257 = vmatprep.subr.mxu0 0.0
    %1258 = vmatpush1.msra.mxu0 0.0
    %1259 = vmatprep.subr.mxu0 0.0
    %1260 = vmatpush1.msra.mxu0 0.0
    %1261 = vmatprep.subr.mxu0 0.0
    %1262 = vmatpush1.msra.mxu0 0.0
    %1263 = vmatprep.subr.mxu0 0.0
    %1264 = vmatpush1.msra.mxu0 0.0
    %1265 = vmatprep.subr.mxu0 0.0
    %1266 = vmatpush1.msra.mxu0 0.0
    %1267 = vmatprep.mubr.f32.mxu0 0.0
    %1268 = vmatmul.mubr.f32.gmra.mrb[0].mxu0 %v1201
    %v1269 = vpop.f32.mrb[0].mxu0
    %v1270 = vadd.f32 0.0, %v1269
    %v1271 = vpop.f32.mrb[0].mxu0
    %v1272 = vadd.f32 0.0, %v1271
    %1273 = vdwg.mxu0
    %v1274 = vadd.f32 %v234, %v1272
    %v1275 = vmax.f32 %v1274, 0.0
    %v1276 = vsel %vm423, %v1275, -inf
    %1277 = vmax.xlane.f32.xlu0 %v1276
    %v1278 = vpop.xlane.xlu0 %1277
    %v1279 = vsub.f32 %v1275, %v1278
    %v1280 = vmul.f32 %v1279, 1.442695
    %v1281 = vpow.pop %v1280
    %v1282 = vsel %vm423, %v1281, 0.0
    %1283 = vadd.xlane.f32.xlu0 %v1282
    %v1284 = vpop.xlane.xlu0 %1283
    %v1285 = vrcp.pop %v1284
    %v1286 = vmul.f32 %v1281, %v1285
    %1288 = vset.pattern.permute.xlu0 0
    %1289 = vperm.xlu0 %1288, %v1286
    %v1290 = vpop.permute.xlu0 %1289
    %v1292 = vmul.f32 %v1290, %v71
    %1293 = vset.pattern.permute.xlu0 1
    %1294 = vperm.xlu0 %1293, %v1286
    %v1295 = vpop.permute.xlu0 %1294
    %v1297 = vmul.f32 %v1295, %v72
    %v1298 = vadd.f32 %v1292, %v1297
    %1299 = vset.pattern.permute.xlu0 2
    %1300 = vperm.xlu0 %1299, %v1286
    %v1301 = vpop.permute.xlu0 %1300
    %v1303 = vmul.f32 %v1301, %v73
    %v1304 = vadd.f32 %v1298, %v1303
    %1305 = vset.pattern.permute.xlu0 3
    %1306 = vperm.xlu0 %1305, %v1286
    %v1307 = vpop.permute.xlu0 %1306
    %v1309 = vmul.f32 %v1307, %v74
    %v1310 = vadd.f32 %v1304, %v1309
    %v1311 = vadd.f32 %v232, %v1270
    %v1313 = vsel %vm114, %v1310, 0
    %1315 = vmatprep.subr.mxu0 0.0
    %1316 = vmatpush1.msra.mxu0 %v83
    %1317 = vmatprep.subr.mxu0 0.0
    %1318 = vmatpush1.msra.mxu0 %v84
    %1319 = vmatprep.subr.mxu0 0.0
    %1320 = vmatpush1.msra.mxu0 %v85
    %1321 = vmatprep.subr.mxu0 0.0
    %1322 = vmatpush1.msra.mxu0 %v86
    %1323 = vmatprep.subr.mxu0 0.0
    %1324 = vmatpush1.msra.mxu0 0.0
    %1325 = vmatprep.subr.mxu0 0.0
    %1326 = vmatpush1.msra.mxu0 0.0
    %1327 = vmatprep.subr.mxu0 0.0
    %1328 = vmatpush1.msra.mxu0 0.0
    %1329 = vmatprep.subr.mxu0 0.0
    %1330 = vmatpush1.msra.mxu0 0.0
    %1331 = vmatprep.subr.mxu0 0.0
    %1332 = vmatpush1.msra.mxu0 0.0
    %1333 = vmatprep.subr.mxu0 0.0
    %1334 = vmatpush1.msra.mxu0 0.0
    %1335 = vmatprep.subr.mxu0 0.0
    %1336 = vmatpush1.msra.mxu0 0.0
    %1337 = vmatprep.subr.mxu0 0.0
    %1338 = vmatpush1.msra.mxu0 0.0
    %1339 = vmatprep.subr.mxu0 0.0
    %1340 = vmatpush1.msra.mxu0 0.0
    %1341 = vmatprep.subr.mxu0 0.0
    %1342 = vmatpush1.msra.mxu0 0.0
    %1343 = vmatprep.subr.mxu0 0.0
    %1344 = vmatpush1.msra.mxu0 0.0
    %1345 = vmatprep.subr.mxu0 0.0
    %1346 = vmatpush1.msra.mxu0 0.0
    %1347 = vmatprep.subr.mxu0 0.0
    %1348 = vmatpush1.msra.mxu0 0.0
    %1349 = vmatprep.subr.mxu0 0.0
    %1350 = vmatpush1.msra.mxu0 0.0
    %1351 = vmatprep.subr.mxu0 0.0
    %1352 = vmatpush1.msra.mxu0 0.0
    %1353 = vmatprep.subr.mxu0 0.0
    %1354 = vmatpush1.msra.mxu0 0.0
    %1355 = vmatprep.subr.mxu0 0.0
    %1356 = vmatpush1.msra.mxu0 0.0
    %1357 = vmatprep.subr.mxu0 0.0
    %1358 = vmatpush1.msra.mxu0 0.0
    %1359 = vmatprep.subr.mxu0 0.0
    %1360 = vmatpush1.msra.mxu0 0.0
    %1361 = vmatprep.subr.mxu0 0.0
    %1362 = vmatpush1.msra.mxu0 0.0
    %1363 = vmatprep.subr.mxu0 0.0
    %1364 = vmatpush1.msra.mxu0 0.0
    %1365 = vmatprep.subr.mxu0 0.0
    %1366 = vmatpush1.msra.mxu0 0.0
    %1367 = vmatprep.subr.mxu0 0.0
    %1368 = vmatpush1.msra.mxu0 0.0
    %1369 = vmatprep.subr.mxu0 0.0
    %1370 = vmatpush1.msra.mxu0 0.0
    %1371 = vmatprep.subr.mxu0 0.0
    %1372 = vmatpush1.msra.mxu0 0.0
    %1373 = vmatprep.subr.mxu0 0.0
    %1374 = vmatpush1.msra.mxu0 0.0
    %1375 = vmatprep.subr.mxu0 0.0
    %1376 = vmatpush1.msra.mxu0 0.0
    %1377 = vmatprep.subr.mxu0 0.0
    %1378 = vmatpush1.msra.mxu0 0.0
    %1379 = vmatprep.mubr.f32.mxu0 0.0
    %1380 = vmatmul.mubr.f32.gmra.mrb[0].mxu0 %v1313
    %v1381 = vpop.f32.mrb[0].mxu0
    %v1382 = vadd.f32 0.0, %v1381
    %v1383 = vpop.f32.mrb[0].mxu0
    %1384 = vdwg.mxu0
    %v1385 = vadd.f32 %v1311, %v1382
    %v1386 = vxor.u32 %v1385, 2147483648
    %v1387 = vmul.f32 %v1386, 1.442695
    %v1388 = vpow.pop %v1387
    %v1389 = vadd.f32 %v1388, 1.0
    %v1390 = vrcp.pop %v1389
    %v1391 = vmul.f32 1.0, %v1390
    %v1392 = vmul.f32 %v1391, 2.0
    %v1393 = vsub.f32 %v1392, 1.0
    %v1394 = vmul.f32 %v1391, %v1191
    %1396 = vrot.lane.b32.xlu0 %v1393, 64
    %v1397 = vpop.permute.xlu0 %1396
    %v1399 = vmul.f32 %v1391, %v1397
    %1401 = vrot.lane.b32.xlu0 %v1399, 32
    %v1402 = vpop.permute.xlu0 %1401
    %v1404 = vadd.f32 %v1394, %v1402
    %v1405 = vtanh.pop %v1404
    %1407 = vrot.lane.b32.xlu0 %v1405, 64
    %v1408 = vpop.permute.xlu0 %1407
    %v1410 = vmul.f32 %v1391, %v1408
    %1412 = vrot.lane.b32.xlu0 %v1410, 32
    %v1413 = vpop.permute.xlu0 %1412
    %v1414 = vsel %vm114, %v1413, 0
    %1416 = vmatprep.subr.mxu0 %v76
    %1417 = vmatpush1.msra.mxu0 %v75
    %1418 = vmatprep.subr.mxu0 %v78
    %1419 = vmatpush1.msra.mxu0 %v77
    %1420 = vmatprep.subr.mxu0 %v80
    %1421 = vmatpush1.msra.mxu0 %v79
    %1422 = vmatprep.subr.mxu0 %v82
    %1423 = vmatpush1.msra.mxu0 %v81
    %1424 = vmatprep.subr.mxu0 0.0
    %1425 = vmatpush1.msra.mxu0 0.0
    %1426 = vmatprep.subr.mxu0 0.0
    %1427 = vmatpush1.msra.mxu0 0.0
    %1428 = vmatprep.subr.mxu0 0.0
    %1429 = vmatpush1.msra.mxu0 0.0
    %1430 = vmatprep.subr.mxu0 0.0
    %1431 = vmatpush1.msra.mxu0 0.0
    %1432 = vmatprep.subr.mxu0 0.0
    %1433 = vmatpush1.msra.mxu0 0.0
    %1434 = vmatprep.subr.mxu0 0.0
    %1435 = vmatpush1.msra.mxu0 0.0
    %1436 = vmatprep.subr.mxu0 0.0
    %1437 = vmatpush1.msra.mxu0 0.0
    %1438 = vmatprep.subr.mxu0 0.0
    %1439 = vmatpush1.msra.mxu0 0.0
    %1440 = vmatprep.subr.mxu0 0.0
    %1441 = vmatpush1.msra.mxu0 0.0
    %1442 = vmatprep.subr.mxu0 0.0
    %1443 = vmatpush1.msra.mxu0 0.0
    %1444 = vmatprep.subr.mxu0 0.0
    %1445 = vmatpush1.msra.mxu0 0.0
    %1446 = vmatprep.subr.mxu0 0.0
    %1447 = vmatpush1.msra.mxu0 0.0
    %1448 = vmatprep.subr.mxu0 0.0
    %1449 = vmatpush1.msra.mxu0 0.0
    %1450 = vmatprep.subr.mxu0 0.0
    %1451 = vmatpush1.msra.mxu0 0.0
    %1452 = vmatprep.subr.mxu0 0.0
    %1453 = vmatpush1.msra.mxu0 0.0
    %1454 = vmatprep.subr.mxu0 0.0
    %1455 = vmatpush1.msra.mxu0 0.0
    %1456 = vmatprep.subr.mxu0 0.0
    %1457 = vmatpush1.msra.mxu0 0.0
    %1458 = vmatprep.subr.mxu0 0.0
    %1459 = vmatpush1.msra.mxu0 0.0
    %1460 = vmatprep.subr.mxu0 0.0
    %1461 = vmatpush1.msra.mxu0 0.0
    %1462 = vmatprep.subr.mxu0 0.0
    %1463 = vmatpush1.msra.mxu0 0.0
    %1464 = vmatprep.subr.mxu0 0.0
    %1465 = vmatpush1.msra.mxu0 0.0
    %1466 = vmatprep.subr.mxu0 0.0
    %1467 = vmatpush1.msra.mxu0 0.0
    %1468 = vmatprep.subr.mxu0 0.0
    %1469 = vmatpush1.msra.mxu0 0.0
    %1470 = vmatprep.subr.mxu0 0.0
    %1471 = vmatpush1.msra.mxu0 0.0
    %1472 = vmatprep.subr.mxu0 0.0
    %1473 = vmatpush1.msra.mxu0 0.0
    %1474 = vmatprep.subr.mxu0 0.0
    %1475 = vmatpush1.msra.mxu0 0.0
    %1476 = vmatprep.subr.mxu0 0.0
    %1477 = vmatpush1.msra.mxu0 0.0
    %1478 = vmatprep.subr.mxu0 0.0
    %1479 = vmatpush1.msra.mxu0 0.0
    %1480 = vmatprep.mubr.f32.mxu0 0.0
    %1481 = vmatmul.mubr.f32.gmra.mrb[0].mxu0 %v1414
    %v1482 = vpop.f32.mrb[0].mxu0
    %v1483 = vadd.f32 0.0, %v1482
    %v1484 = vpop.f32.mrb[0].mxu0
    %v1485 = vadd.f32 0.0, %v1484
    %1486 = vdwg.mxu0
    %v1487 = vadd.f32 %v240, %v1485
    %v1488 = vmax.f32 %v1487, 0.0
    %v1489 = vsel %vm423, %v1488, -inf
    %1490 = vmax.xlane.f32.xlu0 %v1489
    %v1491 = vpop.xlane.xlu0 %1490
    %v1492 = vsub.f32 %v1488, %v1491
    %v1493 = vmul.f32 %v1492, 1.442695
    %v1494 = vpow.pop %v1493
    %v1495 = vsel %vm423, %v1494, 0.0
    %1496 = vadd.xlane.f32.xlu0 %v1495
    %v1497 = vpop.xlane.xlu0 %1496
    %v1498 = vrcp.pop %v1497
    %v1499 = vmul.f32 %v1494, %v1498
    %1501 = vset.pattern.permute.xlu0 0
    %1502 = vperm.xlu0 %1501, %v1499
    %v1503 = vpop.permute.xlu0 %1502
    %v1505 = vmul.f32 %v1503, %v71
    %1506 = vset.pattern.permute.xlu0 1
    %1507 = vperm.xlu0 %1506, %v1499
    %v1508 = vpop.permute.xlu0 %1507
    %v1510 = vmul.f32 %v1508, %v72
    %v1511 = vadd.f32 %v1505, %v1510
    %1512 = vset.pattern.permute.xlu0 2
    %1513 = vperm.xlu0 %1512, %v1499
    %v1514 = vpop.permute.xlu0 %1513
    %v1516 = vmul.f32 %v1514, %v73
    %v1517 = vadd.f32 %v1511, %v1516
    %1518 = vset.pattern.permute.xlu0 3
    %1519 = vperm.xlu0 %1518, %v1499
    %v1520 = vpop.permute.xlu0 %1519
    %v1522 = vmul.f32 %v1520, %v74
    %v1523 = vadd.f32 %v1517, %v1522
    %v1524 = vadd.f32 %v238, %v1483
    %v1526 = vsel %vm114, %v1523, 0
    %1528 = vmatprep.subr.mxu0 0.0
    %1529 = vmatpush1.msra.mxu0 %v83
    %1530 = vmatprep.subr.mxu0 0.0
    %1531 = vmatpush1.msra.mxu0 %v84
    %1532 = vmatprep.subr.mxu0 0.0
    %1533 = vmatpush1.msra.mxu0 %v85
    %1534 = vmatprep.subr.mxu0 0.0
    %1535 = vmatpush1.msra.mxu0 %v86
    %1536 = vmatprep.subr.mxu0 0.0
    %1537 = vmatpush1.msra.mxu0 0.0
    %1538 = vmatprep.subr.mxu0 0.0
    %1539 = vmatpush1.msra.mxu0 0.0
    %1540 = vmatprep.subr.mxu0 0.0
    %1541 = vmatpush1.msra.mxu0 0.0
    %1542 = vmatprep.subr.mxu0 0.0
    %1543 = vmatpush1.msra.mxu0 0.0
    %1544 = vmatprep.subr.mxu0 0.0
    %1545 = vmatpush1.msra.mxu0 0.0
    %1546 = vmatprep.subr.mxu0 0.0
    %1547 = vmatpush1.msra.mxu0 0.0
    %1548 = vmatprep.subr.mxu0 0.0
    %1549 = vmatpush1.msra.mxu0 0.0
    %1550 = vmatprep.subr.mxu0 0.0
    %1551 = vmatpush1.msra.mxu0 0.0
    %1552 = vmatprep.subr.mxu0 0.0
    %1553 = vmatpush1.msra.mxu0 0.0
    %1554 = vmatprep.subr.mxu0 0.0
    %1555 = vmatpush1.msra.mxu0 0.0
    %1556 = vmatprep.subr.mxu0 0.0
    %1557 = vmatpush1.msra.mxu0 0.0
    %1558 = vmatprep.subr.mxu0 0.0
    %1559 = vmatpush1.msra.mxu0 0.0
    %1560 = vmatprep.subr.mxu0 0.0
    %1561 = vmatpush1.msra.mxu0 0.0
    %1562 = vmatprep.subr.mxu0 0.0
    %1563 = vmatpush1.msra.mxu0 0.0
    %1564 = vmatprep.subr.mxu0 0.0
    %1565 = vmatpush1.msra.mxu0 0.0
    %1566 = vmatprep.subr.mxu0 0.0
    %1567 = vmatpush1.msra.mxu0 0.0
    %1568 = vmatprep.subr.mxu0 0.0
    %1569 = vmatpush1.msra.mxu0 0.0
    %1570 = vmatprep.subr.mxu0 0.0
    %1571 = vmatpush1.msra.mxu0 0.0
    %1572 = vmatprep.subr.mxu0 0.0
    %1573 = vmatpush1.msra.mxu0 0.0
    %1574 = vmatprep.subr.mxu0 0.0
    %1575 = vmatpush1.msra.mxu0 0.0
    %1576 = vmatprep.subr.mxu0 0.0
    %1577 = vmatpush1.msra.mxu0 0.0
    %1578 = vmatprep.subr.mxu0 0.0
    %1579 = vmatpush1.msra.mxu0 0.0
    %1580 = vmatprep.subr.mxu0 0.0
    %1581 = vmatpush1.msra.mxu0 0.0
    %1582 = vmatprep.subr.mxu0 0.0
    %1583 = vmatpush1.msra.mxu0 0.0
    %1584 = vmatprep.subr.mxu0 0.0
    %1585 = vmatpush1.msra.mxu0 0.0
    %1586 = vmatprep.subr.mxu0 0.0
    %1587 = vmatpush1.msra.mxu0 0.0
    %1588 = vmatprep.subr.mxu0 0.0
    %1589 = vmatpush1.msra.mxu0 0.0
    %1590 = vmatprep.subr.mxu0 0.0
    %1591 = vmatpush1.msra.mxu0 0.0
    %1592 = vmatprep.mubr.f32.mxu0 0.0
    %1593 = vmatmul.mubr.f32.gmra.mrb[0].mxu0 %v1526
    %v1594 = vpop.f32.mrb[0].mxu0
    %v1595 = vadd.f32 0.0, %v1594
    %v1596 = vpop.f32.mrb[0].mxu0
    %1597 = vdwg.mxu0
    %v1598 = vadd.f32 %v1524, %v1595
    %v1599 = vxor.u32 %v1598, 2147483648
    %v1600 = vmul.f32 %v1599, 1.442695
    %v1601 = vpow.pop %v1600
    %v1602 = vadd.f32 %v1601, 1.0
    %v1603 = vrcp.pop %v1602
    %v1604 = vmul.f32 1.0, %v1603
    %v1605 = vmul.f32 %v1604, 2.0
    %v1606 = vsub.f32 %v1605, 1.0
    %v1607 = vmul.f32 %v1604, %v1404
    %1609 = vrot.lane.b32.xlu0 %v1606, 64
    %v1610 = vpop.permute.xlu0 %1609
    %v1612 = vmul.f32 %v1604, %v1610
    %1614 = vrot.lane.b32.xlu0 %v1612, 32
    %v1615 = vpop.permute.xlu0 %1614
    %v1617 = vadd.f32 %v1607, %v1615
    %v1618 = vtanh.pop %v1617
    %1620 = vrot.lane.b32.xlu0 %v1618, 64
    %v1621 = vpop.permute.xlu0 %1620
    %v1623 = vmul.f32 %v1604, %v1621
    %v1624 = vld [vmem:[#allocation7] sm:$0xff]
    %v1625 = vld [vmem:[#allocation7 + $0x8] sm:$0xff]
    %v1626 = vld [vmem:[#allocation7 + $0x10] sm:$0xff]
    %v1627 = vld [vmem:[#allocation7 + $0x18] sm:$0xff]
    %v1628 = vld [vmem:[%s7] sm:$0x1]
    %v1630 = vlaneseq
    %v1631 = vshrl.u32 %v1630, 7
    %v1632 = vsub.s32 0, %v1631
    %v1633 = vrot.slane %v1628, %v1632
    %1636 = vrot.lane.b32.xlu0 %v1623, 32
    %v1637 = vpop.permute.xlu0 %1636
    %v1638 = vsel %vm114, %v1637, 0
    %1640 = vmatprep.subr.mxu0 0.0
    %1641 = vmatpush1.msra.mxu0 %v1624
    %1642 = vmatprep.subr.mxu0 0.0
    %1643 = vmatpush1.msra.mxu0 %v1625
    %1644 = vmatprep.subr.mxu0 0.0
    %1645 = vmatpush1.msra.mxu0 %v1626
    %1646 = vmatprep.subr.mxu0 0.0
    %1647 = vmatpush1.msra.mxu0 %v1627
    %1648 = vmatprep.subr.mxu0 0.0
    %1649 = vmatpush1.msra.mxu0 0.0
    %1650 = vmatprep.subr.mxu0 0.0
    %1651 = vmatpush1.msra.mxu0 0.0
    %1652 = vmatprep.subr.mxu0 0.0
    %1653 = vmatpush1.msra.mxu0 0.0
    %1654 = vmatprep.subr.mxu0 0.0
    %1655 = vmatpush1.msra.mxu0 0.0
    %1656 = vmatprep.subr.mxu0 0.0
    %1657 = vmatpush1.msra.mxu0 0.0
    %1658 = vmatprep.subr.mxu0 0.0
    %1659 = vmatpush1.msra.mxu0 0.0
    %1660 = vmatprep.subr.mxu0 0.0
    %1661 = vmatpush1.msra.mxu0 0.0
    %1662 = vmatprep.subr.mxu0 0.0
    %1663 = vmatpush1.msra.mxu0 0.0
    %1664 = vmatprep.subr.mxu0 0.0
    %1665 = vmatpush1.msra.mxu0 0.0
    %1666 = vmatprep.subr.mxu0 0.0
    %1667 = vmatpush1.msra.mxu0 0.0
    %1668 = vmatprep.subr.mxu0 0.0
    %1669 = vmatpush1.msra.mxu0 0.0
    %1670 = vmatprep.subr.mxu0 0.0
    %1671 = vmatpush1.msra.mxu0 0.0
    %1672 = vmatprep.subr.mxu0 0.0
    %1673 = vmatpush1.msra.mxu0 0.0
    %1674 = vmatprep.subr.mxu0 0.0
    %1675 = vmatpush1.msra.mxu0 0.0
    %1676 = vmatprep.subr.mxu0 0.0
    %1677 = vmatpush1.msra.mxu0 0.0
    %1678 = vmatprep.subr.mxu0 0.0
    %1679 = vmatpush1.msra.mxu0 0.0
    %1680 = vmatprep.subr.mxu0 0.0
    %1681 = vmatpush1.msra.mxu0 0.0
    %1682 = vmatprep.subr.mxu0 0.0
    %1683 = vmatpush1.msra.mxu0 0.0
    %1684 = vmatprep.subr.mxu0 0.0
    %1685 = vmatpush1.msra.mxu0 0.0
    %1686 = vmatprep.subr.mxu0 0.0
    %1687 = vmatpush1.msra.mxu0 0.0
    %1688 = vmatprep.subr.mxu0 0.0
    %1689 = vmatpush1.msra.mxu0 0.0
    %1690 = vmatprep.subr.mxu0 0.0
    %1691 = vmatpush1.msra.mxu0 0.0
    %1692 = vmatprep.subr.mxu0 0.0
    %1693 = vmatpush1.msra.mxu0 0.0
    %1694 = vmatprep.subr.mxu0 0.0
    %1695 = vmatpush1.msra.mxu0 0.0
    %1696 = vmatprep.subr.mxu0 0.0
    %1697 = vmatpush1.msra.mxu0 0.0
    %1698 = vmatprep.subr.mxu0 0.0
    %1699 = vmatpush1.msra.mxu0 0.0
    %1700 = vmatprep.subr.mxu0 0.0
    %1701 = vmatpush1.msra.mxu0 0.0
    %1702 = vmatprep.subr.mxu0 0.0
    %1703 = vmatpush1.msra.mxu0 0.0
    %1704 = vmatprep.mubr.f32.mxu0 0.0
    %1705 = vmatmul.mubr.f32.gmra.mrb[0].mxu0 %v348
    %v1706 = vpop.f32.mrb[0].mxu0
    %v1707 = vadd.f32 %v1633, %v1706
    %v1708 = vpop.f32.mrb[0].mxu0
    %1709 = vmatprep.mubr.f32.mxu0 0.0
    %1710 = vmatmul.mubr.f32.gmra.mrb[0].mxu0 %v562
    %v1711 = vpop.f32.mrb[0].mxu0
    %v1712 = vadd.f32 %v1633, %v1711
    %v1713 = vpop.f32.mrb[0].mxu0
    %1714 = vmatprep.mubr.f32.mxu0 0.0
    %1715 = vmatmul.mubr.f32.gmra.mrb[0].mxu0 %v775
    %v1716 = vpop.f32.mrb[0].mxu0
    %v1717 = vadd.f32 %v1633, %v1716
    %v1718 = vpop.f32.mrb[0].mxu0
    %1719 = vmatprep.mubr.f32.mxu0 0.0
    %1720 = vmatmul.mubr.f32.gmra.mrb[0].mxu0 %v988
    %v1721 = vpop.f32.mrb[0].mxu0
    %v1722 = vadd.f32 %v1633, %v1721
    %v1723 = vpop.f32.mrb[0].mxu0
    %1724 = vmatprep.mubr.f32.mxu0 0.0
    %1725 = vmatmul.mubr.f32.gmra.mrb[0].mxu0 %v1201
    %v1726 = vpop.f32.mrb[0].mxu0
    %v1727 = vadd.f32 %v1633, %v1726
    %v1728 = vpop.f32.mrb[0].mxu0
    %1729 = vmatprep.mubr.f32.mxu0 0.0
    %1730 = vmatmul.mubr.f32.gmra.mrb[0].mxu0 %v1414
    %v1731 = vpop.f32.mrb[0].mxu0
    %v1732 = vadd.f32 %v1633, %v1731
    %v1733 = vpop.f32.mrb[0].mxu0
    %1734 = vmatprep.mubr.f32.mxu0 0.0
    %1735 = vmatmul.mubr.f32.gmra.mrb[0].mxu0 %v1638
    %v1736 = vpop.f32.mrb[0].mxu0
    %v1737 = vadd.f32 %v1633, %v1736
    %v1738 = vpop.f32.mrb[0].mxu0
    %1739 = vdwg.mxu0
    %1740 = vst [vmem:[#allocation8] sm:$0xff] %v1707
    %1741 = vst [vmem:[#allocation8 + $0x8] sm:$0xff] %v1712
    %1742 = vst [vmem:[#allocation8 + $0x10] sm:$0xff] %v1717
    %1743 = vst [vmem:[#allocation8 + $0x18] sm:$0xff] %v1722
    %1744 = vst [vmem:[#allocation8 + $0x20] sm:$0xff] %v1727
    %1745 = vst [vmem:[#allocation8 + $0x28] sm:$0xff] %v1732
    %1746 = vst [vmem:[#allocation8 + $0x30] sm:$0xff] %v1737
    // Predicated region
    $region46: #{tpu_custom_call.1} parent=1 // pred_check
      _
    $region47: #{tpu_custom_call.1} parent=1 // pred_check_branch
      %1748 = sbr.rel (0) target = $region49
    $region48: #{tpu_custom_call.1} parent=1 // pred_region
      %s1750 = ssub.s32 896, 896
      %1751 = vsyncadd [#allocation4], %s1750
      %s1752 = sshll.u32 [#allocation8], 4
      %s1753 = int_to_ptr.vmem [resolvable:$true] %s1752
      %1758 = dma.vmem_to_hbm [thread:$0]  %s1753, 896, %s8, [#allocation4], 128, 128, 8
    $region49: #{tpu_custom_call.1} parent=1 // pred_fallthru
      _
    // Predicated region
    $region50: #{tpu_custom_call.1} parent=1 // pred_check
      _
    $region51: #{tpu_custom_call.1} parent=1 // pred_check_branch
      %1760 = sbr.rel (0) target = $region53
    $region52: #{tpu_custom_call.1} parent=1 // pred_region
      %1761 = dma.done [#allocation4], 896
    $region53: #{tpu_custom_call.1} parent=1 // pred_fallthru
      _
    %1762 = vsyncpa [#allocation3], 1
    %1763 = vsyncpa [#allocation6], 1
    %1764 = vsyncpa [#allocation4], 1

</llo_original>
